<compile_context>
chip_gen: v6e
topology: v6e:2x2x1
jax: 0.10.0
libtpu: 0.0.40
codegen_flags: <defaults>
</compile_context>

<pallas_src>
import functools
import math

import jax
import jax.numpy as jnp
from jax.experimental import pallas as pl
from jax.experimental.pallas import tpu as pltpu

K = 4            # every ConvTranspose2d in G uses a 4x4 kernel
EPS = 1e-8       # nn.InstanceNorm2d(..., eps=1e-08) in the module
LRELU_SLOPE = 0.2


def _round_up(x, m):
    return (x + m - 1) // m * m


def _pick_tk(kd, cap=512):
    """Largest multiple of 128 that divides kd (kd % 128 == 0) and is <= cap."""
    best = 128
    t = 128
    while t <= min(kd, cap):
        if kd % t == 0:
            best = t
        t += 128
    return best


# ----------------------------------------------------------------------------
# Fused Pallas kernel:  (P, Kd) @ (Kd, G*Cout) -> InstanceNorm -> LeakyReLU
#                       (or -> Tanh for the last layer).
# Grid: (N, Kd/tk).  The K axis is a reduction into a VMEM f32 accumulator.
# The G*Cout output columns are "G interleaved spatial groups x Cout channels";
# InstanceNorm statistics are over all P rows and all G groups per channel.
# ----------------------------------------------------------------------------
def _fused_gemm_kernel(p_ref, w_ref, o_ref, acc_ref, *, groups, cout,
                       apply_in, act):
    k = pl.program_id(1)

    @pl.when(k == 0)
    def _init():
        acc_ref[...] = jnp.zeros_like(acc_ref)

    acc_ref[...] += jnp.dot(p_ref[0], w_ref[...],
                            preferred_element_type=jnp.float32)

    @pl.when(k == pl.num_programs(1) - 1)
    def _epilogue():
        x = acc_ref[...]                                    # (P, G*Cout) f32
        if apply_in:
            # One-pass InstanceNorm2d(affine=False): per-channel stats over
            # all P rows and all G spatial groups (biased variance).
            s1 = jnp.sum(x, axis=0, keepdims=True)          # (1, G*Cout)
            s2 = jnp.sum(x * x, axis=0, keepdims=True)      # (1, G*Cout)
            s1g = s1[:, 0:cout]
            s2g = s2[:, 0:cout]
            for g in range(1, groups):
                s1g = s1g + s1[:, g * cout:(g + 1) * cout]
                s2g = s2g + s2[:, g * cout:(g + 1) * cout]
            cnt = float(x.shape[0] * groups)
            mean = s1g / cnt                                # (1, Cout)
            var = jnp.maximum(s2g / cnt - mean * mean, 0.0)
            inv = jax.lax.rsqrt(var + EPS)
            mean_b = jnp.concatenate([mean] * groups, axis=1)   # (1, G*Cout)
            inv_b = jnp.concatenate([inv] * groups, axis=1)
            x = (x - mean_b) * inv_b
        if act == "lrelu":
            x = jnp.where(x >= 0, x, LRELU_SLOPE * x)
        else:  # "tanh"
            x = jnp.tanh(x)
        o_ref[0] = x.astype(o_ref.dtype)


def _fused_call(patches, wmat, *, groups, cout, apply_in, act, out_dtype,
                max_tk=512):
    """patches: (N, P, Kd) bf16, wmat: (Kd, groups*cout) bf16; Kd % 128 == 0."""
    N, P, Kd = patches.shape
    GC = groups * cout
    assert wmat.shape == (Kd, GC), (wmat.shape, Kd, GC)
    tk = _pick_tk(Kd, max_tk)
    nk = Kd // tk
    kernel = functools.partial(_fused_gemm_kernel, groups=groups, cout=cout,
                               apply_in=apply_in, act=act)
    return pl.pallas_call(
        kernel,
        out_shape=jax.ShapeDtypeStruct((N, P, GC), out_dtype),
        grid_spec=pltpu.PrefetchScalarGridSpec(
            num_scalar_prefetch=0,
            grid=(N, nk),
            in_specs=[
                pl.BlockSpec((1, P, tk), lambda n, k: (n, 0, k)),
                pl.BlockSpec((tk, GC), lambda n, k: (k, 0)),
            ],
            out_specs=pl.BlockSpec((1, P, GC), lambda n, k: (n, 0, 0)),
            scratch_shapes=[pltpu.VMEM((P, GC), jnp.float32)],
        ),
        compiler_params=pltpu.CompilerParams(
            dimension_semantics=("parallel", "arbitrary"),
            vmem_limit_bytes=48 * 1024 * 1024,
        ),
    )(patches, wmat)


# ----------------------------------------------------------------------------
# Plain-JAX glue: weight packing, lane-aligned K padding, NHWC patch building.
# ----------------------------------------------------------------------------
def _wmat_first(w):
    """ConvTranspose2d(k=4, s=1, p=0) on a 1x1 input is a pure GEMM:
    (Cin, Cout, 4, 4) -> (Cin, 16*Cout); output column = (ky*4+kx)*Cout + co."""
    cin, cout = w.shape[0], w.shape[1]
    return jnp.transpose(w, (0, 2, 3, 1)).reshape(cin, 16 * cout)


def _wmat_up(w):
    """Phase-combined weight for ConvTranspose2d(k=4, s=2, p=1):
    (Cin, Cout, 4, 4) -> (9*Cin, 4*Cout).  Row = (dy*3+dx)*Cin + ci for the
    3x3 window tap on the pad=1, un-dilated input; column = (ry*2+rx)*Cout+co
    for output phase (oy%2, ox%2) = (ry, rx).  Tap (dy, dx) feeds phase
    (ry, rx) through kernel element (ky, kx) = (ry+3-2*dy, rx+3-2*dx)."""
    cin, cout = w.shape[0], w.shape[1]
    m = jnp.zeros((3, 3, cin, 2, 2, cout), w.dtype)
    for dy in range(3):
        for ry in range(2):
            ky = ry + 3 - 2 * dy
            if not 0 <= ky < K:
                continue
            for dx in range(3):
                for rx in range(2):
                    kx = rx + 3 - 2 * dx
                    if not 0 <= kx < K:
                        continue
                    m = m.at[dy, dx, :, ry, rx, :].set(w[:, :, ky, kx])
    return m.reshape(9 * cin, 4 * cout)


def _pad_k(patches, wmat):
    """Zero-pad the contraction dim to a multiple of 128 and cast to bf16."""
    kd = patches.shape[-1]
    kd_pad = _round_up(kd, 128)
    if kd_pad != kd:
        patches = jnp.pad(patches, ((0, 0), (0, 0), (0, kd_pad - kd)))
        wmat = jnp.pad(wmat, ((0, kd_pad - kd), (0, 0)))
    return patches.astype(jnp.bfloat16), wmat.astype(jnp.bfloat16)


def _first_layer(z, w):
    """z: (N, Cin, 1, 1) -> (N, 4, 4, Cout) bf16  (ConvT s=1 p=0 + IN + LReLU)."""
    n = z.shape[0]
    cin, cout = w.shape[0], w.shape[1]
    patches, wmat = _pad_k(z.reshape(n, 1, cin), _wmat_first(w))
    out = _fused_call(patches, wmat, groups=16, cout=cout, apply_in=True,
                      act="lrelu", out_dtype=jnp.bfloat16)
    return out.reshape(n, K, K, cout)


def _up_layer(x, w, *, last):
    """x: (N, H, W, Cin) NHWC -> (N, 2H, 2W, Cout).
    ConvT(k=4, s=2, p=1) + (IN + LeakyReLU) or + Tanh (last layer)."""
    n, h, wid, cin = x.shape
    cout = w.shape[1]
    xp = jnp.pad(x, ((0, 0), (1, 1), (1, 1), (0, 0)))
    # 3x3 im2col on the un-dilated input (no structural zeros).
    # NOTE: a further optimization would assemble these patches inside the
    # kernel (pl.ANY + manual DMA) to avoid materializing the 9x tensor in HBM.
    cols = [xp[:, dy:dy + h, dx:dx + wid, :]
            for dy in range(3) for dx in range(3)]
    patches = jnp.concatenate(cols, axis=-1).reshape(n, h * wid, 9 * cin)
    patches, wmat = _pad_k(patches, _wmat_up(w))
    out = _fused_call(patches, wmat, groups=4, cout=cout, apply_in=not last,
                      act="tanh" if last else "lrelu",
                      out_dtype=jnp.float32 if last else jnp.bfloat16)
    # De-interleave the 4 output phases: (N, H*W, 4*Cout) -> (N, 2H, 2W, Cout).
    out = out.reshape(n, h, wid, 2, 2, cout).transpose(0, 1, 3, 2, 4, 5)
    return out.reshape(n, 2 * h, 2 * wid, cout)


# ----------------------------------------------------------------------------
# Parameter construction + forward (mirrors G.__init__/forward, BN=False,
# relu=False, bias=False path).
# ----------------------------------------------------------------------------
def init_g_params(key, input_dim, output_dim, image_size, Gscale,
                  hidden_scale=2):
    up_times = int(round(math.log2(image_size))) - 3
    first_hidden = image_size * Gscale
    cfg = [(input_dim, first_hidden)]
    hidden = first_hidden
    for _ in range(up_times):
        cfg.append((hidden, int(hidden / hidden_scale)))
        hidden = hidden // 2
    cfg.append((hidden, output_dim))
    weights = []
    for cin, cout in cfg:
        key, sub = jax.random.split(key)
        weights.append(0.02 * jax.random.normal(sub, (cin, cout, K, K),
                                                jnp.float32))
    return weights


def g_forward(z, weights):
    """z: (N, input_dim, 1, 1) NCHW -> (N, output_dim, image_size, image_size)."""
    x = _first_layer(z, weights[0])          # (N, 4, 4, C) bf16, NHWC
    for w in weights[1:-1]:
        x = _up_layer(x, w, last=False)
    x = _up_layer(x, weights[-1], last=True)  # (N, H, W, Cout) f32
    return jnp.transpose(x, (0, 3, 1, 2))     # NHWC -> NCHW at the boundary


def g_forward_ref(z, weights):
    """Pure-JAX f32 reference (ConvTranspose2d == lhs-dilated conv with the
    spatially flipped kernel) used to validate the Pallas path numerically."""
    x = z
    for i, w in enumerate(weights):
        s, p = (1, 0) if i == 0 else (2, 1)
        kern = jnp.flip(w, (2, 3)).transpose(1, 0, 2, 3)     # (Cout, Cin, K, K)
        x = jax.lax.conv_general_dilated(
            x, kern, window_strides=(1, 1),
            padding=[(K - 1 - p, K - 1 - p)] * 2,
            lhs_dilation=(s, s),
            dimension_numbers=("NCHW", "OIHW", "NCHW"))
        if i < len(weights) - 1:
            mean = jnp.mean(x, axis=(2, 3), keepdims=True)
            var = jnp.mean(jnp.square(x - mean), axis=(2, 3), keepdims=True)
            x = (x - mean) * jax.lax.rsqrt(var + EPS)
            x = jnp.where(x >= 0, x, LRELU_SLOPE * x)
        else:
            x = jnp.tanh(x)
    return x


if __name__ == "__main__":
    key = jax.random.PRNGKey(0)
    kz, kp = jax.random.split(key)

    # Small config consistent with the module: image_size=16 -> up_times=1,
    # Gscale=4 -> first_hidden_dim=64.  Layers:
    #   ConvT(8,64,4,1,0)+IN+LReLU -> ConvT(64,32,4,2,1)+IN+LReLU
    #   -> ConvT(32,3,4,2,1)+Tanh
    N, input_dim, output_dim, image_size, Gscale = 2, 8, 3, 16, 4
    weights = init_g_params(kp, input_dim, output_dim, image_size, Gscale)
    z = jax.random.normal(kz, (N, input_dim, 1, 1), jnp.float32)

    out = jax.block_until_ready(jax.jit(g_forward)(z, weights))
    assert out.shape == (N, output_dim, image_size, image_size), out.shape
    assert bool(jnp.all(jnp.isfinite(out)))

    # Numerical check against an independent f32 reference (bf16 tolerance).
    ref = g_forward_ref(z, weights)
    err = float(jnp.max(jnp.abs(out - ref)))
    assert err < 0.2, f"max abs error vs reference: {err}"

    print("KERNEL_OK")
</pallas_src>

<mosaic_0001>
module attributes {stable_mosaic.version = 11 : i64} {
  func.func @_fused_gemm_kernel(%arg0: i32, %arg1: i32, %arg2: memref<1x1x128xbf16, #tpu.memory_space<vmem>>, %arg3: memref<128x1024xbf16, #tpu.memory_space<vmem>>, %arg4: memref<1x1x1024xbf16, #tpu.memory_space<vmem>>, %arg5: memref<1x1024xf32, #tpu.memory_space<vmem>>) attributes {dimension_semantics = [#tpu.dimension_semantics<parallel>, #tpu.dimension_semantics<arbitrary>], iteration_bounds = array<i64: 2, 1>, scalar_prefetch = 0 : i64, scratch_operands = 1 : i64, tpu.core_type = #tpu.core_type<tc>, window_params = [{transform_indices = @transform_0, window_bounds = array<i64: 1, 1, 128>}, {transform_indices = @transform_1, window_bounds = array<i64: 128, 1024>}, {transform_indices = @transform_2, window_bounds = array<i64: 1, 1, 1024>}]} {
    %c0_i32 = arith.constant 0 : i32
    %0 = arith.cmpi eq, %arg1, %c0_i32 : i32
    %1 = arith.extui %0 : i1 to i32
    %c0_i32_0 = arith.constant 0 : i32
    %2 = arith.cmpi ne, %1, %c0_i32_0 : i32
    scf.if %2 {
      %cst_11 = arith.constant 0.000000e+00 : f32
      %13 = vector.broadcast %cst_11 : f32 to vector<1x1024xf32>
      %c0_12 = arith.constant 0 : index
      %c0_13 = arith.constant 0 : index
      %14 = vector.load %arg5[%c0_12, %c0_13] : memref<1x1024xf32, #tpu.memory_space<vmem>>, vector<1x1024xf32>
      tpu.vector_store %arg5[%c0_12, %c0_13], %13 {strides = array<i32>} : memref<1x1024xf32, #tpu.memory_space<vmem>>, vector<1x1024xf32>,
    } else {
    }
    %c0 = arith.constant 0 : index
    %c0_1 = arith.constant 0 : index
    %3 = vector.load %arg5[%c0, %c0_1] : memref<1x1024xf32, #tpu.memory_space<vmem>>, vector<1x1024xf32>
    %c0_2 = arith.constant 0 : index
    %c0_3 = arith.constant 0 : index
    %c0_4 = arith.constant 0 : index
    %4 = vector.load %arg2[%c0_2, %c0_3, %c0_4] : memref<1x1x128xbf16, #tpu.memory_space<vmem>>, vector<1x1x128xbf16>
    %5 = vector.shape_cast %4 : vector<1x1x128xbf16> to vector<1x128xbf16>
    %c0_5 = arith.constant 0 : index
    %c0_6 = arith.constant 0 : index
    %6 = vector.load %arg3[%c0_5, %c0_6] : memref<128x1024xbf16, #tpu.memory_space<vmem>>, vector<128x1024xbf16>
    %cst = arith.constant dense<0.000000e+00> : vector<1x1024xf32>
    %7 = tpu.matmul %5, %6, %cst {dimension_numbers = #tpu.dot_dimension_numbers<[1], [0], [0], [1], [0, 0, 1, 1], [], []>} : vector<1x128xbf16>, vector<128x1024xbf16>, vector<1x1024xf32> -> vector<1x1024xf32>
    %8 = arith.addf %3, %7 : vector<1x1024xf32>
    %c0_7 = arith.constant 0 : index
    %c0_8 = arith.constant 0 : index
    %9 = vector.load %arg5[%c0_7, %c0_8] : memref<1x1024xf32, #tpu.memory_space<vmem>>, vector<1x1024xf32>
    tpu.vector_store %arg5[%c0_7, %c0_8], %8 {strides = array<i32>} : memref<1x1024xf32, #tpu.memory_space<vmem>>, vector<1x1024xf32>,
    %c0_i32_9 = arith.constant 0 : i32
    %10 = arith.cmpi eq, %arg1, %c0_i32_9 : i32
    %11 = arith.extui %10 : i1 to i32
    %c0_i32_10 = arith.constant 0 : i32
    %12 = arith.cmpi ne, %11, %c0_i32_10 : i32
    scf.if %12 {
      %c0_11 = arith.constant 0 : index
      %c0_12 = arith.constant 0 : index
      %13 = vector.load %arg5[%c0_11, %c0_12] : memref<1x1024xf32, #tpu.memory_space<vmem>>, vector<1x1024xf32>
      %cst_13 = arith.constant dense<0.000000e+00> : vector<1024xf32>
      %14 = vector.multi_reduction <add>, %13, %cst_13 [0] : vector<1x1024xf32> to vector<1024xf32>
      %15 = vector.shape_cast %14 : vector<1024xf32> to vector<1x1024xf32>
      %16 = arith.mulf %13, %13 : vector<1x1024xf32>
      %cst_14 = arith.constant dense<0.000000e+00> : vector<1024xf32>
      %17 = vector.multi_reduction <add>, %16, %cst_14 [0] : vector<1x1024xf32> to vector<1024xf32>
      %18 = vector.shape_cast %17 : vector<1024xf32> to vector<1x1024xf32>
      %19 = vector.extract_strided_slice %15 {offsets = [0, 0], sizes = [1, 64], strides = [1, 1]} : vector<1x1024xf32> to vector<1x64xf32>
      %20 = vector.extract_strided_slice %18 {offsets = [0, 0], sizes = [1, 64], strides = [1, 1]} : vector<1x1024xf32> to vector<1x64xf32>
      %21 = vector.extract_strided_slice %15 {offsets = [0, 64], sizes = [1, 64], strides = [1, 1]} : vector<1x1024xf32> to vector<1x64xf32>
      %22 = arith.addf %19, %21 : vector<1x64xf32>
      %23 = vector.extract_strided_slice %18 {offsets = [0, 64], sizes = [1, 64], strides = [1, 1]} : vector<1x1024xf32> to vector<1x64xf32>
      %24 = arith.addf %20, %23 : vector<1x64xf32>
      %25 = vector.extract_strided_slice %15 {offsets = [0, 128], sizes = [1, 64], strides = [1, 1]} : vector<1x1024xf32> to vector<1x64xf32>
      %26 = arith.addf %22, %25 : vector<1x64xf32>
      %27 = vector.extract_strided_slice %18 {offsets = [0, 128], sizes = [1, 64], strides = [1, 1]} : vector<1x1024xf32> to vector<1x64xf32>
      %28 = arith.addf %24, %27 : vector<1x64xf32>
      %29 = vector.extract_strided_slice %15 {offsets = [0, 192], sizes = [1, 64], strides = [1, 1]} : vector<1x1024xf32> to vector<1x64xf32>
      %30 = arith.addf %26, %29 : vector<1x64xf32>
      %31 = vector.extract_strided_slice %18 {offsets = [0, 192], sizes = [1, 64], strides = [1, 1]} : vector<1x1024xf32> to vector<1x64xf32>
      %32 = arith.addf %28, %31 : vector<1x64xf32>
      %33 = vector.extract_strided_slice %15 {offsets = [0, 256], sizes = [1, 64], strides = [1, 1]} : vector<1x1024xf32> to vector<1x64xf32>
      %34 = arith.addf %30, %33 : vector<1x64xf32>
      %35 = vector.extract_strided_slice %18 {offsets = [0, 256], sizes = [1, 64], strides = [1, 1]} : vector<1x1024xf32> to vector<1x64xf32>
      %36 = arith.addf %32, %35 : vector<1x64xf32>
      %37 = vector.extract_strided_slice %15 {offsets = [0, 320], sizes = [1, 64], strides = [1, 1]} : vector<1x1024xf32> to vector<1x64xf32>
      %38 = arith.addf %34, %37 : vector<1x64xf32>
      %39 = vector.extract_strided_slice %18 {offsets = [0, 320], sizes = [1, 64], strides = [1, 1]} : vector<1x1024xf32> to vector<1x64xf32>
      %40 = arith.addf %36, %39 : vector<1x64xf32>
      %41 = vector.extract_strided_slice %15 {offsets = [0, 384], sizes = [1, 64], strides = [1, 1]} : vector<1x1024xf32> to vector<1x64xf32>
      %42 = arith.addf %38, %41 : vector<1x64xf32>
      %43 = vector.extract_strided_slice %18 {offsets = [0, 384], sizes = [1, 64], strides = [1, 1]} : vector<1x1024xf32> to vector<1x64xf32>
      %44 = arith.addf %40, %43 : vector<1x64xf32>
      %45 = vector.extract_strided_slice %15 {offsets = [0, 448], sizes = [1, 64], strides = [1, 1]} : vector<1x1024xf32> to vector<1x64xf32>
      %46 = arith.addf %42, %45 : vector<1x64xf32>
      %47 = vector.extract_strided_slice %18 {offsets = [0, 448], sizes = [1, 64], strides = [1, 1]} : vector<1x1024xf32> to vector<1x64xf32>
      %48 = arith.addf %44, %47 : vector<1x64xf32>
      %49 = vector.extract_strided_slice %15 {offsets = [0, 512], sizes = [1, 64], strides = [1, 1]} : vector<1x1024xf32> to vector<1x64xf32>
      %50 = arith.addf %46, %49 : vector<1x64xf32>
      %51 = vector.extract_strided_slice %18 {offsets = [0, 512], sizes = [1, 64], strides = [1, 1]} : vector<1x1024xf32> to vector<1x64xf32>
      %52 = arith.addf %48, %51 : vector<1x64xf32>
      %53 = vector.extract_strided_slice %15 {offsets = [0, 576], sizes = [1, 64], strides = [1, 1]} : vector<1x1024xf32> to vector<1x64xf32>
      %54 = arith.addf %50, %53 : vector<1x64xf32>
      %55 = vector.extract_strided_slice %18 {offsets = [0, 576], sizes = [1, 64], strides = [1, 1]} : vector<1x1024xf32> to vector<1x64xf32>
      %56 = arith.addf %52, %55 : vector<1x64xf32>
      %57 = vector.extract_strided_slice %15 {offsets = [0, 640], sizes = [1, 64], strides = [1, 1]} : vector<1x1024xf32> to vector<1x64xf32>
      %58 = arith.addf %54, %57 : vector<1x64xf32>
      %59 = vector.extract_strided_slice %18 {offsets = [0, 640], sizes = [1, 64], strides = [1, 1]} : vector<1x1024xf32> to vector<1x64xf32>
      %60 = arith.addf %56, %59 : vector<1x64xf32>
      %61 = vector.extract_strided_slice %15 {offsets = [0, 704], sizes = [1, 64], strides = [1, 1]} : vector<1x1024xf32> to vector<1x64xf32>
      %62 = arith.addf %58, %61 : vector<1x64xf32>
      %63 = vector.extract_strided_slice %18 {offsets = [0, 704], sizes = [1, 64], strides = [1, 1]} : vector<1x1024xf32> to vector<1x64xf32>
      %64 = arith.addf %60, %63 : vector<1x64xf32>
      %65 = vector.extract_strided_slice %15 {offsets = [0, 768], sizes = [1, 64], strides = [1, 1]} : vector<1x1024xf32> to vector<1x64xf32>
      %66 = arith.addf %62, %65 : vector<1x64xf32>
      %67 = vector.extract_strided_slice %18 {offsets = [0, 768], sizes = [1, 64], strides = [1, 1]} : vector<1x1024xf32> to vector<1x64xf32>
      %68 = arith.addf %64, %67 : vector<1x64xf32>
      %69 = vector.extract_strided_slice %15 {offsets = [0, 832], sizes = [1, 64], strides = [1, 1]} : vector<1x1024xf32> to vector<1x64xf32>
      %70 = arith.addf %66, %69 : vector<1x64xf32>
      %71 = vector.extract_strided_slice %18 {offsets = [0, 832], sizes = [1, 64], strides = [1, 1]} : vector<1x1024xf32> to vector<1x64xf32>
      %72 = arith.addf %68, %71 : vector<1x64xf32>
      %73 = vector.extract_strided_slice %15 {offsets = [0, 896], sizes = [1, 64], strides = [1, 1]} : vector<1x1024xf32> to vector<1x64xf32>
      %74 = arith.addf %70, %73 : vector<1x64xf32>
      %75 = vector.extract_strided_slice %18 {offsets = [0, 896], sizes = [1, 64], strides = [1, 1]} : vector<1x1024xf32> to vector<1x64xf32>
      %76 = arith.addf %72, %75 : vector<1x64xf32>
      %77 = vector.extract_strided_slice %15 {offsets = [0, 960], sizes = [1, 64], strides = [1, 1]} : vector<1x1024xf32> to vector<1x64xf32>
      %78 = arith.addf %74, %77 : vector<1x64xf32>
      %79 = vector.extract_strided_slice %18 {offsets = [0, 960], sizes = [1, 64], strides = [1, 1]} : vector<1x1024xf32> to vector<1x64xf32>
      %80 = arith.addf %76, %79 : vector<1x64xf32>
      %cst_15 = arith.constant 1.600000e+01 : f32
      %81 = vector.broadcast %cst_15 : f32 to vector<1x64xf32>
      %82 = arith.divf %78, %81 : vector<1x64xf32>
      %cst_16 = arith.constant 1.600000e+01 : f32
      %83 = vector.broadcast %cst_16 : f32 to vector<1x64xf32>
      %84 = arith.divf %80, %83 : vector<1x64xf32>
      %85 = arith.mulf %82, %82 : vector<1x64xf32>
      %86 = arith.subf %84, %85 : vector<1x64xf32>
      %cst_17 = arith.constant 0.000000e+00 : f32
      %87 = vector.broadcast %cst_17 : f32 to vector<1x64xf32>
      %88 = arith.maximumf %86, %87 : vector<1x64xf32>
      %cst_18 = arith.constant 9.99999993E-9 : f32
      %89 = vector.broadcast %cst_18 : f32 to vector<1x64xf32>
      %90 = arith.addf %88, %89 : vector<1x64xf32>
      %91 = math.rsqrt %90 : vector<1x64xf32>
      %92 = tpu.concatenate %82, %82, %82, %82, %82, %82, %82, %82, %82, %82, %82, %82, %82, %82, %82, %82 in 1 : vector<1x64xf32>, vector<1x64xf32>, vector<1x64xf32>, vector<1x64xf32>, vector<1x64xf32>, vector<1x64xf32>, vector<1x64xf32>, vector<1x64xf32>, vector<1x64xf32>, vector<1x64xf32>, vector<1x64xf32>, vector<1x64xf32>, vector<1x64xf32>, vector<1x64xf32>, vector<1x64xf32>, vector<1x64xf32> -> vector<1x1024xf32>
      %93 = tpu.concatenate %91, %91, %91, %91, %91, %91, %91, %91, %91, %91, %91, %91, %91, %91, %91, %91 in 1 : vector<1x64xf32>, vector<1x64xf32>, vector<1x64xf32>, vector<1x64xf32>, vector<1x64xf32>, vector<1x64xf32>, vector<1x64xf32>, vector<1x64xf32>, vector<1x64xf32>, vector<1x64xf32>, vector<1x64xf32>, vector<1x64xf32>, vector<1x64xf32>, vector<1x64xf32>, vector<1x64xf32>, vector<1x64xf32> -> vector<1x1024xf32>
      %94 = arith.subf %13, %92 : vector<1x1024xf32>
      %95 = arith.mulf %94, %93 : vector<1x1024xf32>
      %cst_19 = arith.constant 0.000000e+00 : f32
      %96 = vector.broadcast %cst_19 : f32 to vector<1x1024xf32>
      %97 = arith.cmpf oge, %95, %96 : vector<1x1024xf32>
      %cst_20 = arith.constant 2.000000e-01 : f32
      %98 = vector.broadcast %cst_20 : f32 to vector<1x1024xf32>
      %99 = arith.mulf %98, %95 : vector<1x1024xf32>
      %100 = arith.select %97, %95, %99 : vector<1x1024xi1>, vector<1x1024xf32>
      %101 = arith.truncf %100 : vector<1x1024xf32> to vector<1x1024xbf16>
      %c0_21 = arith.constant 0 : index
      %c0_22 = arith.constant 0 : index
      %c0_23 = arith.constant 0 : index
      %102 = vector.load %arg4[%c0_21, %c0_22, %c0_23] : memref<1x1x1024xbf16, #tpu.memory_space<vmem>>, vector<1x1x1024xbf16>
      %103 = vector.shape_cast %102 : vector<1x1x1024xbf16> to vector<1x1024xbf16>
      %104 = vector.shape_cast %101 : vector<1x1024xbf16> to vector<1x1x1024xbf16>
      tpu.vector_store %arg4[%c0_21, %c0_22, %c0_23], %104 {strides = array<i32>} : memref<1x1x1024xbf16, #tpu.memory_space<vmem>>, vector<1x1x1024xbf16>,
    } else {
    }
    return
  }
  func.func @transform_0(%arg0: i32, %arg1: i32) -> (i32, i32, i32) {
    %c0_i32 = arith.constant 0 : i32
    %c0_i32_0 = arith.constant 0 : i32
    return %arg0, %c0_i32, %arg1 : i32, i32, i32
  }
  func.func @transform_1(%arg0: i32, %arg1: i32) -> (i32, i32) {
    %c0_i32 = arith.constant 0 : i32
    %c0_i32_0 = arith.constant 0 : i32
    return %arg1, %c0_i32 : i32, i32
  }
  func.func @transform_2(%arg0: i32, %arg1: i32) -> (i32, i32, i32) {
    %c0_i32 = arith.constant 0 : i32
    %c0_i32_0 = arith.constant 0 : i32
    %c0_i32_1 = arith.constant 0 : i32
    return %arg0, %c0_i32, %c0_i32_0 : i32, i32, i32
  }
}

module attributes {stable_mosaic.version = 11 : i64} {
  func.func @_fused_gemm_kernel(%arg0: i32, %arg1: i32, %arg2: memref<1x16x128xbf16, #tpu.memory_space<vmem>>, %arg3: memref<128x128xbf16, #tpu.memory_space<vmem>>, %arg4: memref<1x16x128xbf16, #tpu.memory_space<vmem>>, %arg5: memref<16x128xf32, #tpu.memory_space<vmem>>) attributes {dimension_semantics = [#tpu.dimension_semantics<parallel>, #tpu.dimension_semantics<arbitrary>], iteration_bounds = array<i64: 2, 5>, scalar_prefetch = 0 : i64, scratch_operands = 1 : i64, tpu.core_type = #tpu.core_type<tc>, window_params = [{transform_indices = @transform_0, window_bounds = array<i64: 1, 16, 128>}, {transform_indices = @transform_1, window_bounds = array<i64: 128, 128>}, {transform_indices = @transform_2, window_bounds = array<i64: 1, 16, 128>}]} {
    %c0_i32 = arith.constant 0 : i32
    %0 = arith.cmpi eq, %arg1, %c0_i32 : i32
    %1 = arith.extui %0 : i1 to i32
    %c0_i32_0 = arith.constant 0 : i32
    %2 = arith.cmpi ne, %1, %c0_i32_0 : i32
    scf.if %2 {
      %cst_10 = arith.constant 0.000000e+00 : f32
      %13 = vector.broadcast %cst_10 : f32 to vector<16x128xf32>
      %c0_11 = arith.constant 0 : index
      %c0_12 = arith.constant 0 : index
      %14 = vector.load %arg5[%c0_11, %c0_12] : memref<16x128xf32, #tpu.memory_space<vmem>>, vector<16x128xf32>
      tpu.vector_store %arg5[%c0_11, %c0_12], %13 {strides = array<i32>} : memref<16x128xf32, #tpu.memory_space<vmem>>, vector<16x128xf32>,
    } else {
    }
    %c0 = arith.constant 0 : index
    %c0_1 = arith.constant 0 : index
    %3 = vector.load %arg5[%c0, %c0_1] : memref<16x128xf32, #tpu.memory_space<vmem>>, vector<16x128xf32>
    %c0_2 = arith.constant 0 : index
    %c0_3 = arith.constant 0 : index
    %c0_4 = arith.constant 0 : index
    %4 = vector.load %arg2[%c0_2, %c0_3, %c0_4] : memref<1x16x128xbf16, #tpu.memory_space<vmem>>, vector<1x16x128xbf16>
    %5 = vector.shape_cast %4 : vector<1x16x128xbf16> to vector<16x128xbf16>
    %c0_5 = arith.constant 0 : index
    %c0_6 = arith.constant 0 : index
    %6 = vector.load %arg3[%c0_5, %c0_6] : memref<128x128xbf16, #tpu.memory_space<vmem>>, vector<128x128xbf16>
    %cst = arith.constant dense<0.000000e+00> : vector<16x128xf32>
    %7 = tpu.matmul %5, %6, %cst {dimension_numbers = #tpu.dot_dimension_numbers<[1], [0], [0], [1], [0, 0, 1, 1], [], []>} : vector<16x128xbf16>, vector<128x128xbf16>, vector<16x128xf32> -> vector<16x128xf32>
    %8 = arith.addf %3, %7 : vector<16x128xf32>
    %c0_7 = arith.constant 0 : index
    %c0_8 = arith.constant 0 : index
    %9 = vector.load %arg5[%c0_7, %c0_8] : memref<16x128xf32, #tpu.memory_space<vmem>>, vector<16x128xf32>
    tpu.vector_store %arg5[%c0_7, %c0_8], %8 {strides = array<i32>} : memref<16x128xf32, #tpu.memory_space<vmem>>, vector<16x128xf32>,
    %c4_i32 = arith.constant 4 : i32
    %10 = arith.cmpi eq, %arg1, %c4_i32 : i32
    %11 = arith.extui %10 : i1 to i32
    %c0_i32_9 = arith.constant 0 : i32
    %12 = arith.cmpi ne, %11, %c0_i32_9 : i32
    scf.if %12 {
      %c0_10 = arith.constant 0 : index
      %c0_11 = arith.constant 0 : index
      %13 = vector.load %arg5[%c0_10, %c0_11] : memref<16x128xf32, #tpu.memory_space<vmem>>, vector<16x128xf32>
      %cst_12 = arith.constant dense<0.000000e+00> : vector<128xf32>
      %14 = vector.multi_reduction <add>, %13, %cst_12 [0] : vector<16x128xf32> to vector<128xf32>
      %15 = vector.shape_cast %14 : vector<128xf32> to vector<1x128xf32>
      %16 = arith.mulf %13, %13 : vector<16x128xf32>
      %cst_13 = arith.constant dense<0.000000e+00> : vector<128xf32>
      %17 = vector.multi_reduction <add>, %16, %cst_13 [0] : vector<16x128xf32> to vector<128xf32>
      %18 = vector.shape_cast %17 : vector<128xf32> to vector<1x128xf32>
      %19 = vector.extract_strided_slice %15 {offsets = [0, 0], sizes = [1, 32], strides = [1, 1]} : vector<1x128xf32> to vector<1x32xf32>
      %20 = vector.extract_strided_slice %18 {offsets = [0, 0], sizes = [1, 32], strides = [1, 1]} : vector<1x128xf32> to vector<1x32xf32>
      %21 = vector.extract_strided_slice %15 {offsets = [0, 32], sizes = [1, 32], strides = [1, 1]} : vector<1x128xf32> to vector<1x32xf32>
      %22 = arith.addf %19, %21 : vector<1x32xf32>
      %23 = vector.extract_strided_slice %18 {offsets = [0, 32], sizes = [1, 32], strides = [1, 1]} : vector<1x128xf32> to vector<1x32xf32>
      %24 = arith.addf %20, %23 : vector<1x32xf32>
      %25 = vector.extract_strided_slice %15 {offsets = [0, 64], sizes = [1, 32], strides = [1, 1]} : vector<1x128xf32> to vector<1x32xf32>
      %26 = arith.addf %22, %25 : vector<1x32xf32>
      %27 = vector.extract_strided_slice %18 {offsets = [0, 64], sizes = [1, 32], strides = [1, 1]} : vector<1x128xf32> to vector<1x32xf32>
      %28 = arith.addf %24, %27 : vector<1x32xf32>
      %29 = vector.extract_strided_slice %15 {offsets = [0, 96], sizes = [1, 32], strides = [1, 1]} : vector<1x128xf32> to vector<1x32xf32>
      %30 = arith.addf %26, %29 : vector<1x32xf32>
      %31 = vector.extract_strided_slice %18 {offsets = [0, 96], sizes = [1, 32], strides = [1, 1]} : vector<1x128xf32> to vector<1x32xf32>
      %32 = arith.addf %28, %31 : vector<1x32xf32>
      %cst_14 = arith.constant 6.400000e+01 : f32
      %33 = vector.broadcast %cst_14 : f32 to vector<1x32xf32>
      %34 = arith.divf %30, %33 : vector<1x32xf32>
      %cst_15 = arith.constant 6.400000e+01 : f32
      %35 = vector.broadcast %cst_15 : f32 to vector<1x32xf32>
      %36 = arith.divf %32, %35 : vector<1x32xf32>
      %37 = arith.mulf %34, %34 : vector<1x32xf32>
      %38 = arith.subf %36, %37 : vector<1x32xf32>
      %cst_16 = arith.constant 0.000000e+00 : f32
      %39 = vector.broadcast %cst_16 : f32 to vector<1x32xf32>
      %40 = arith.maximumf %38, %39 : vector<1x32xf32>
      %cst_17 = arith.constant 9.99999993E-9 : f32
      %41 = vector.broadcast %cst_17 : f32 to vector<1x32xf32>
      %42 = arith.addf %40, %41 : vector<1x32xf32>
      %43 = math.rsqrt %42 : vector<1x32xf32>
      %44 = tpu.concatenate %34, %34, %34, %34 in 1 : vector<1x32xf32>, vector<1x32xf32>, vector<1x32xf32>, vector<1x32xf32> -> vector<1x128xf32>
      %45 = tpu.concatenate %43, %43, %43, %43 in 1 : vector<1x32xf32>, vector<1x32xf32>, vector<1x32xf32>, vector<1x32xf32> -> vector<1x128xf32>
      %46 = vector.broadcast %44 : vector<1x128xf32> to vector<16x128xf32>
      %47 = arith.subf %13, %46 : vector<16x128xf32>
      %48 = vector.broadcast %45 : vector<1x128xf32> to vector<16x128xf32>
      %49 = arith.mulf %47, %48 : vector<16x128xf32>
      %cst_18 = arith.constant 0.000000e+00 : f32
      %50 = vector.broadcast %cst_18 : f32 to vector<16x128xf32>
      %51 = arith.cmpf oge, %49, %50 : vector<16x128xf32>
      %cst_19 = arith.constant 2.000000e-01 : f32
      %52 = vector.broadcast %cst_19 : f32 to vector<16x128xf32>
      %53 = arith.mulf %52, %49 : vector<16x128xf32>
      %54 = arith.select %51, %49, %53 : vector<16x128xi1>, vector<16x128xf32>
      %55 = arith.truncf %54 : vector<16x128xf32> to vector<16x128xbf16>
      %c0_20 = arith.constant 0 : index
      %c0_21 = arith.constant 0 : index
      %c0_22 = arith.constant 0 : index
      %56 = vector.load %arg4[%c0_20, %c0_21, %c0_22] : memref<1x16x128xbf16, #tpu.memory_space<vmem>>, vector<1x16x128xbf16>
      %57 = vector.shape_cast %56 : vector<1x16x128xbf16> to vector<16x128xbf16>
      %58 = vector.shape_cast %55 : vector<16x128xbf16> to vector<1x16x128xbf16>
      tpu.vector_store %arg4[%c0_20, %c0_21, %c0_22], %58 {strides = array<i32>} : memref<1x16x128xbf16, #tpu.memory_space<vmem>>, vector<1x16x128xbf16>,
    } else {
    }
    return
  }
  func.func @transform_0(%arg0: i32, %arg1: i32) -> (i32, i32, i32) {
    %c0_i32 = arith.constant 0 : i32
    %c0_i32_0 = arith.constant 0 : i32
    return %arg0, %c0_i32, %arg1 : i32, i32, i32
  }
  func.func @transform_1(%arg0: i32, %arg1: i32) -> (i32, i32) {
    %c0_i32 = arith.constant 0 : i32
    %c0_i32_0 = arith.constant 0 : i32
    return %arg1, %c0_i32 : i32, i32
  }
  func.func @transform_2(%arg0: i32, %arg1: i32) -> (i32, i32, i32) {
    %c0_i32 = arith.constant 0 : i32
    %c0_i32_0 = arith.constant 0 : i32
    %c0_i32_1 = arith.constant 0 : i32
    return %arg0, %c0_i32, %c0_i32_0 : i32, i32, i32
  }
}

module attributes {stable_mosaic.version = 11 : i64} {
  func.func @_fused_gemm_kernel(%arg0: i32, %arg1: i32, %arg2: memref<1x64x384xbf16, #tpu.memory_space<vmem>>, %arg3: memref<384x12xbf16, #tpu.memory_space<vmem>>, %arg4: memref<1x64x12xf32, #tpu.memory_space<vmem>>, %arg5: memref<64x12xf32, #tpu.memory_space<vmem>>) attributes {dimension_semantics = [#tpu.dimension_semantics<parallel>, #tpu.dimension_semantics<arbitrary>], iteration_bounds = array<i64: 2, 1>, scalar_prefetch = 0 : i64, scratch_operands = 1 : i64, tpu.core_type = #tpu.core_type<tc>, window_params = [{transform_indices = @transform_0, window_bounds = array<i64: 1, 64, 384>}, {transform_indices = @transform_1, window_bounds = array<i64: 384, 12>}, {transform_indices = @transform_2, window_bounds = array<i64: 1, 64, 12>}]} {
    %c0_i32 = arith.constant 0 : i32
    %0 = arith.cmpi eq, %arg1, %c0_i32 : i32
    %1 = arith.extui %0 : i1 to i32
    %c0_i32_0 = arith.constant 0 : i32
    %2 = arith.cmpi ne, %1, %c0_i32_0 : i32
    scf.if %2 {
      %cst_11 = arith.constant 0.000000e+00 : f32
      %13 = vector.broadcast %cst_11 : f32 to vector<64x12xf32>
      %c0_12 = arith.constant 0 : index
      %c0_13 = arith.constant 0 : index
      %14 = vector.load %arg5[%c0_12, %c0_13] : memref<64x12xf32, #tpu.memory_space<vmem>>, vector<64x12xf32>
      tpu.vector_store %arg5[%c0_12, %c0_13], %13 {strides = array<i32>} : memref<64x12xf32, #tpu.memory_space<vmem>>, vector<64x12xf32>,
    } else {
    }
    %c0 = arith.constant 0 : index
    %c0_1 = arith.constant 0 : index
    %3 = vector.load %arg5[%c0, %c0_1] : memref<64x12xf32, #tpu.memory_space<vmem>>, vector<64x12xf32>
    %c0_2 = arith.constant 0 : index
    %c0_3 = arith.constant 0 : index
    %c0_4 = arith.constant 0 : index
    %4 = vector.load %arg2[%c0_2, %c0_3, %c0_4] : memref<1x64x384xbf16, #tpu.memory_space<vmem>>, vector<1x64x384xbf16>
    %5 = vector.shape_cast %4 : vector<1x64x384xbf16> to vector<64x384xbf16>
    %c0_5 = arith.constant 0 : index
    %c0_6 = arith.constant 0 : index
    %6 = vector.load %arg3[%c0_5, %c0_6] : memref<384x12xbf16, #tpu.memory_space<vmem>>, vector<384x12xbf16>
    %cst = arith.constant dense<0.000000e+00> : vector<64x12xf32>
    %7 = tpu.matmul %5, %6, %cst {dimension_numbers = #tpu.dot_dimension_numbers<[1], [0], [0], [1], [0, 0, 1, 1], [], []>} : vector<64x384xbf16>, vector<384x12xbf16>, vector<64x12xf32> -> vector<64x12xf32>
    %8 = arith.addf %3, %7 : vector<64x12xf32>
    %c0_7 = arith.constant 0 : index
    %c0_8 = arith.constant 0 : index
    %9 = vector.load %arg5[%c0_7, %c0_8] : memref<64x12xf32, #tpu.memory_space<vmem>>, vector<64x12xf32>
    tpu.vector_store %arg5[%c0_7, %c0_8], %8 {strides = array<i32>} : memref<64x12xf32, #tpu.memory_space<vmem>>, vector<64x12xf32>,
    %c0_i32_9 = arith.constant 0 : i32
    %10 = arith.cmpi eq, %arg1, %c0_i32_9 : i32
    %11 = arith.extui %10 : i1 to i32
    %c0_i32_10 = arith.constant 0 : i32
    %12 = arith.cmpi ne, %11, %c0_i32_10 : i32
    scf.if %12 {
      %c0_11 = arith.constant 0 : index
      %c0_12 = arith.constant 0 : index
      %13 = vector.load %arg5[%c0_11, %c0_12] : memref<64x12xf32, #tpu.memory_space<vmem>>, vector<64x12xf32>
      %14 = math.tanh %13 : vector<64x12xf32>
      %c0_13 = arith.constant 0 : index
      %c0_14 = arith.constant 0 : index
      %c0_15 = arith.constant 0 : index
      %15 = vector.load %arg4[%c0_13, %c0_14, %c0_15] : memref<1x64x12xf32, #tpu.memory_space<vmem>>, vector<1x64x12xf32>
      %16 = vector.shape_cast %15 : vector<1x64x12xf32> to vector<64x12xf32>
      %17 = vector.shape_cast %14 : vector<64x12xf32> to vector<1x64x12xf32>
      tpu.vector_store %arg4[%c0_13, %c0_14, %c0_15], %17 {strides = array<i32>} : memref<1x64x12xf32, #tpu.memory_space<vmem>>, vector<1x64x12xf32>,
    } else {
    }
    return
  }
  func.func @transform_0(%arg0: i32, %arg1: i32) -> (i32, i32, i32) {
    %c0_i32 = arith.constant 0 : i32
    %c0_i32_0 = arith.constant 0 : i32
    return %arg0, %c0_i32, %arg1 : i32, i32, i32
  }
  func.func @transform_1(%arg0: i32, %arg1: i32) -> (i32, i32) {
    %c0_i32 = arith.constant 0 : i32
    %c0_i32_0 = arith.constant 0 : i32
    return %arg1, %c0_i32 : i32, i32
  }
  func.func @transform_2(%arg0: i32, %arg1: i32) -> (i32, i32, i32) {
    %c0_i32 = arith.constant 0 : i32
    %c0_i32_0 = arith.constant 0 : i32
    %c0_i32_1 = arith.constant 0 : i32
    return %arg0, %c0_i32, %c0_i32_0 : i32, i32, i32
  }
}

</mosaic_0001>

<llo_original>
// kernel: g_forward.3
$region0: #{g_forward.3}
  #allocation0 [shape = 'u32[]', space=smem, size = 0x4, offset = 0x4, fixed_abs, tag = 'smem constant byte address 0x4 - core index']
  #allocation1 [shape = 'u32[144,128]{1,0:T(1,128)}', space=vmem, size = 0x12000, scoped, tag = 'internal scratch']
  #allocation2 [shape = 'f32[1,1024]{1,0:T(1,128)}', space=vmem, size = 0x1000, scoped, tag = 'scratch operand']
  %s0 = inlined_call_operand.vmem [shape: bf16[2,1,128], index: 0, kind: input, shape index: {}]
  %s1 = inlined_call_operand.vmem [shape: bf16[128,1024], index: 1, kind: input, shape index: {}]
  %s2 = inlined_call_operand.vmem [shape: bf16[2,1,1024], index: 2, kind: output, shape index: {}]
  %s3 = sld [smem:[#allocation0]]
  $region49: #{g_forward.3} parent=0
    _
  %s5 = ssub.s32 1, %s3
  %s6 = scalar_select 0, %s5, %s3
  loop: start=0, step=1, limit=4
  $region2: #{g_forward.3} parent=0 // loop_pre_header
    _
  $region3: #{g_forward.3} parent=0 // loop_header
    %s8 = sphi 0, %s12
    %p9 = scmp.ge.s32.totalorder %s8, 4
    %s15 = sphi 0, %s27
    %s16 = sphi 0, %s23
    %s17 = sphi 0, %s15
    %s18 = sphi 0, %s16
    %s19 = sphi 0, %s17
    %s20 = sphi 0, %s18
    %s32 = sphi 0, %s34
    %s35 = sphi 0, %s32
    %s36 = sphi 0, %s35
    %s52 = sphi 0, %s36
    %s58 = sphi 0, %s60
    %s61 = sphi 0, %s58
    %s62 = sphi 0, %s61
    %s78 = sphi 0, %s62
    %s84 = sphi 0, %s86
    %s87 = sphi 0, %s84
    %s88 = sphi 0, %s87
    %s104 = sphi 0, %s88
  $region4: #{g_forward.3} parent=0 // loop_header_branch
    %11 = sbr.rel (%p9) target = $region8
  $region5: #{g_forward.3} parent=0 // loop_body
    %s13 = ssub.s32 %s8, 1
    %s14 = ssub.s32 %s8, 2
    %s21 = sadd.s32 1, %s16
    %p22 = scmp.ge.s32.totalorder %s21, 1
    %s23 = scalar_select %p22, 0, %s21
    %s24 = sadd.s32 1, %s15
    %s25 = scalar_select %p22, %s24, %s15
    %p26 = scmp.ge.s32.totalorder %s25, 2
    %s27 = scalar_select %p26, 0, %s25
    %s28 = ssub.s32 %s15, %s27
    %s29 = ssub.s32 %s16, %s23
    %s30 = sor.u32 %s28, %s29
    %p31 = scmp.eq.s32.totalorder %s30, 0
    %s33 = sadd.s32 %s32, 1
    %s34 = scalar_select %p31, %s32, %s33
    %p37 = pneg %p31
    %p38 = scmp.eq.s32.totalorder %s8, 1
    %p39 = por %p37, %p38
    %p40 = scmp.ne.s32.totalorder %s32, %s35
    %p41 = scmp.eq.s32.totalorder %s8, 0
    %p42 = por %p40, %p41
    %p43 = scmp.ne.s32.totalorder %s32, %s35
    %p44 = scmp.eq.s32.totalorder %s13, 1
    %p45 = por %p43, %p44
    %p46 = scmp.ne.s32.totalorder %s35, %s36
    %p47 = scmp.eq.s32.totalorder %s13, 0
    %p48 = por %p46, %p47
    %p49 = scmp.ne.s32.totalorder %s35, %s36
    %p50 = scmp.eq.s32.totalorder %s14, 1
    %p51 = por %p49, %p50
    %p53 = scmp.ne.s32.totalorder %s36, %s52
    %p54 = scmp.eq.s32.totalorder %s14, 0
    %p55 = por %p53, %p54
    %s56 = ssub.s32 %s16, %s23
    %p57 = scmp.eq.s32.totalorder %s56, 0
    %s59 = sadd.s32 %s58, 1
    %s60 = scalar_select %p57, %s58, %s59
    %p63 = pneg %p57
    %p64 = scmp.eq.s32.totalorder %s8, 1
    %p65 = por %p63, %p64
    %p66 = scmp.ne.s32.totalorder %s58, %s61
    %p67 = scmp.eq.s32.totalorder %s8, 0
    %p68 = por %p66, %p67
    %p69 = scmp.ne.s32.totalorder %s58, %s61
    %p70 = scmp.eq.s32.totalorder %s13, 1
    %p71 = por %p69, %p70
    %p72 = scmp.ne.s32.totalorder %s61, %s62
    %p73 = scmp.eq.s32.totalorder %s13, 0
    %p74 = por %p72, %p73
    %p75 = scmp.ne.s32.totalorder %s61, %s62
    %p76 = scmp.eq.s32.totalorder %s14, 1
    %p77 = por %p75, %p76
    %p79 = scmp.ne.s32.totalorder %s62, %s78
    %p80 = scmp.eq.s32.totalorder %s14, 0
    %p81 = por %p79, %p80
    %s82 = ssub.s32 %s15, %s27
    %p83 = scmp.eq.s32.totalorder %s82, 0
    %s85 = sadd.s32 %s84, 1
    %s86 = scalar_select %p83, %s84, %s85
    %p89 = pneg %p83
    %p90 = scmp.eq.s32.totalorder %s8, 1
    %p91 = por %p89, %p90
    %p92 = scmp.ne.s32.totalorder %s84, %s87
    %p93 = scmp.eq.s32.totalorder %s8, 0
    %p94 = por %p92, %p93
    %p95 = scmp.ne.s32.totalorder %s84, %s87
    %p96 = scmp.eq.s32.totalorder %s13, 1
    %p97 = por %p95, %p96
    %p98 = scmp.ne.s32.totalorder %s87, %s88
    %p99 = scmp.eq.s32.totalorder %s13, 0
    %p100 = por %p98, %p99
    %p101 = scmp.ne.s32.totalorder %s87, %s88
    %p102 = scmp.eq.s32.totalorder %s14, 1
    %p103 = por %p101, %p102
    %p105 = scmp.ne.s32.totalorder %s88, %s104
    %p106 = scmp.eq.s32.totalorder %s14, 0
    %p107 = por %p105, %p106
    %p108 = scmp.le.s32.totalorder 1, %s8
    %p109 = scmp.lt.s32.totalorder %s8, 3
    %p110 = pnand %p108, %p109
    %p111 = pneg %p110
    // Predicated region
    $region9: #{g_forward.3} parent=5 // pred_check
      _
    $region10: #{g_forward.3} parent=5 // pred_check_branch
      %113 = sbr.rel (%p110) target = $region12
    $region11: #{g_forward.3} parent=5 // pred_region
      %s114 = ssub.s32 %s8, 1
      // Predicated region
      $region13: #{g_forward.3} parent=11 // pred_check
        %p115 = pneg %p74
      $region14: #{g_forward.3} parent=11 // pred_check_branch
        %117 = sbr.rel (%p115) target = $region16
      $region15: #{g_forward.3} parent=11 // pred_region
        %s118 = smul.u32 16, %s18
        %p119 = scmp.lt.s32.totalorder %s118, 15
        %s120 = scalar_select %p119, %s118, 15
        %s121 = smul.addr %s120, 8
        %s122 = smul.addr %s121, 4
        %s123 = scalar_lea.vmem %s1, %s122
        %s124 = smul.u32 16, %s18
      $region16: #{g_forward.3} parent=11 // pred_fallthru
        _
    $region12: #{g_forward.3} parent=5 // pred_fallthru
      _
    %p125 = scmp.lt.s32.totalorder %s8, 2
    // Predicated region
    $region17: #{g_forward.3} parent=5 // pred_check
      %p126 = pneg %p125
    $region18: #{g_forward.3} parent=5 // pred_check_branch
      %128 = sbr.rel (%p126) target = $region20
    $region19: #{g_forward.3} parent=5 // pred_region
      // Predicated region
      $region21: #{g_forward.3} parent=19 // pred_check
        %p129 = pneg %p42
      $region22: #{g_forward.3} parent=19 // pred_check_branch
        %131 = sbr.rel (%p129) target = $region24
      $region23: #{g_forward.3} parent=19 // pred_region
        %p132 = scmp.lt.s32.totalorder %s15, 1
        %s133 = scalar_select %p132, %s15, 1
        %p134 = scmp.lt.s32.totalorder %s16, 0
        %s135 = scalar_select %p134, %s16, 0
        %s136 = sadd.s32 %s135, %s133
        %s137 = scalar_lea.vmem %s0, %s136
      $region24: #{g_forward.3} parent=19 // pred_fallthru
        _
    $region20: #{g_forward.3} parent=5 // pred_fallthru
      _
    %p138 = scmp.le.s32.totalorder 1, %s8
    %p139 = scmp.lt.s32.totalorder %s8, 3
    %p140 = pnand %p138, %p139
    %p141 = pneg %p140
    // Predicated region
    $region25: #{g_forward.3} parent=5 // pred_check
      _
    $region26: #{g_forward.3} parent=5 // pred_check_branch
      %143 = sbr.rel (%p140) target = $region28
    $region27: #{g_forward.3} parent=5 // pred_region
      %s144 = ssub.s32 %s8, 1
      %p145 = scmp.lt.s32.totalorder %s17, 1
      %s146 = scalar_select %p145, %s17, 1
      %p147 = scmp.lt.s32.totalorder %s18, 0
      %s148 = scalar_select %p147, %s18, 0
      %s149 = sadd.s32 %s148, %s146
      %s150 = scalar_lea.vmem %s0, %s149
      %p151 = pneg %p48
      %p152 = pneg %p45
      %s153 = smul.u32 16, %s18
      %p154 = scmp.lt.s32.totalorder %s153, 15
      %s155 = scalar_select %p154, %s153, 15
      %s156 = smul.addr %s155, 8
      %s157 = smul.addr %s156, 4
      %s158 = scalar_lea.vmem %s1, %s157
      %p159 = pneg %p74
      %p160 = pneg %p71
      %p161 = pneg %p100
      %p162 = pneg %p97
      %p163 = scmp.lt.s32.totalorder %s17, 1
      %s164 = scalar_select %p163, %s17, 1
      %s165 = smul.addr %s164, 8
      %s166 = scalar_lea.vmem %s2, %s165
      %p167 = scmp.lt.s32.totalorder %s17, 1
      %s168 = scalar_select %p167, %s17, 1
      %p169 = scmp.lt.s32.totalorder %s18, 0
      %s170 = scalar_select %p169, %s18, 0
      %s171 = sadd.s32 %s170, %s168
      %s172 = scalar_lea.vmem %s0, %s171
      %s173 = smul.u32 16, %s18
      %p174 = scmp.lt.s32.totalorder %s173, 15
      %s175 = scalar_select %p174, %s173, 15
      %s176 = smul.addr %s175, 8
      %s177 = smul.addr %s176, 4
      %s178 = scalar_lea.vmem %s1, %s177
      %s179 = smul.u32 16, %s18
      %p180 = scmp.lt.s32.totalorder %s17, 1
      %s181 = scalar_select %p180, %s17, 1
      %s182 = smul.addr %s181, 8
      %s183 = scalar_lea.vmem %s2, %s182
      %p185 = scmp.eq.s32.totalorder %s18, 0
      // Predicated region
      $region29: #{g_forward.3} parent=27 // pred_check
        %p186 = pneg %p185
      $region30: #{g_forward.3} parent=27 // pred_check_branch
        %188 = sbr.rel (%p186) target = $region32
      $region31: #{g_forward.3} parent=27 // pred_region
        %189 = vst [vmem:[#allocation2] sm:$0xff] 0.0
      $region32: #{g_forward.3} parent=27 // pred_fallthru
        _
      %v190 = vld [vmem:[#allocation2] sm:$0xff]
      %v191 = vld [vmem:[%s172] sm:$0x1]
      %v192 = vld [vmem:[%s178] sm:$0xff]
      %v193 = vld [vmem:[%s178 + $0x8] sm:$0xff]
      %v194 = vld [vmem:[%s178 + $0x10] sm:$0xff]
      %v195 = vld [vmem:[%s178 + $0x18] sm:$0xff]
      %v196 = vld [vmem:[%s178 + $0x20] sm:$0xff]
      %v197 = vld [vmem:[%s178 + $0x28] sm:$0xff]
      %v198 = vld [vmem:[%s178 + $0x30] sm:$0xff]
      %v199 = vld [vmem:[%s178 + $0x38] sm:$0xff]
      %v200 = vld [vmem:[%s178 + $0x40] sm:$0xff]
      %v201 = vld [vmem:[%s178 + $0x48] sm:$0xff]
      %v202 = vld [vmem:[%s178 + $0x50] sm:$0xff]
      %v203 = vld [vmem:[%s178 + $0x58] sm:$0xff]
      %v204 = vld [vmem:[%s178 + $0x60] sm:$0xff]
      %v205 = vld [vmem:[%s178 + $0x68] sm:$0xff]
      %v206 = vld [vmem:[%s178 + $0x70] sm:$0xff]
      %v207 = vld [vmem:[%s178 + $0x78] sm:$0xff]
      %v208 = vld [vmem:[%s178 + $0x80] sm:$0xff]
      %v209 = vld [vmem:[%s178 + $0x88] sm:$0xff]
      %v210 = vld [vmem:[%s178 + $0x90] sm:$0xff]
      %v211 = vld [vmem:[%s178 + $0x98] sm:$0xff]
      %v212 = vld [vmem:[%s178 + $0xa0] sm:$0xff]
      %v213 = vld [vmem:[%s178 + $0xa8] sm:$0xff]
      %v214 = vld [vmem:[%s178 + $0xb0] sm:$0xff]
      %v215 = vld [vmem:[%s178 + $0xb8] sm:$0xff]
      %v216 = vld [vmem:[%s178 + $0xc0] sm:$0xff]
      %v217 = vld [vmem:[%s178 + $0xc8] sm:$0xff]
      %v218 = vld [vmem:[%s178 + $0xd0] sm:$0xff]
      %v219 = vld [vmem:[%s178 + $0xd8] sm:$0xff]
      %v220 = vld [vmem:[%s178 + $0xe0] sm:$0xff]
      %v221 = vld [vmem:[%s178 + $0xe8] sm:$0xff]
      %v222 = vld [vmem:[%s178 + $0xf0] sm:$0xff]
      %v223 = vld [vmem:[%s178 + $0xf8] sm:$0xff]
      %v224 = vld [vmem:[%s178 + $0x100] sm:$0xff]
      %v225 = vld [vmem:[%s178 + $0x108] sm:$0xff]
      %v226 = vld [vmem:[%s178 + $0x110] sm:$0xff]
      %v227 = vld [vmem:[%s178 + $0x118] sm:$0xff]
      %v228 = vld [vmem:[%s178 + $0x120] sm:$0xff]
      %v229 = vld [vmem:[%s178 + $0x128] sm:$0xff]
      %v230 = vld [vmem:[%s178 + $0x130] sm:$0xff]
      %v231 = vld [vmem:[%s178 + $0x138] sm:$0xff]
      %v232 = vld [vmem:[%s178 + $0x140] sm:$0xff]
      %v233 = vld [vmem:[%s178 + $0x148] sm:$0xff]
      %v234 = vld [vmem:[%s178 + $0x150] sm:$0xff]
      %v235 = vld [vmem:[%s178 + $0x158] sm:$0xff]
      %v236 = vld [vmem:[%s178 + $0x160] sm:$0xff]
      %v237 = vld [vmem:[%s178 + $0x168] sm:$0xff]
      %v238 = vld [vmem:[%s178 + $0x170] sm:$0xff]
      %v239 = vld [vmem:[%s178 + $0x178] sm:$0xff]
      %v240 = vld [vmem:[%s178 + $0x180] sm:$0xff]
      %v241 = vld [vmem:[%s178 + $0x188] sm:$0xff]
      %v242 = vld [vmem:[%s178 + $0x190] sm:$0xff]
      %v243 = vld [vmem:[%s178 + $0x198] sm:$0xff]
      %v244 = vld [vmem:[%s178 + $0x1a0] sm:$0xff]
      %v245 = vld [vmem:[%s178 + $0x1a8] sm:$0xff]
      %v246 = vld [vmem:[%s178 + $0x1b0] sm:$0xff]
      %v247 = vld [vmem:[%s178 + $0x1b8] sm:$0xff]
      %v248 = vld [vmem:[%s178 + $0x1c0] sm:$0xff]
      %v249 = vld [vmem:[%s178 + $0x1c8] sm:$0xff]
      %v250 = vld [vmem:[%s178 + $0x1d0] sm:$0xff]
      %v251 = vld [vmem:[%s178 + $0x1d8] sm:$0xff]
      %v252 = vld [vmem:[%s178 + $0x1e0] sm:$0xff]
      %v253 = vld [vmem:[%s178 + $0x1e8] sm:$0xff]
      %v254 = vld [vmem:[%s178 + $0x1f0] sm:$0xff]
      %v255 = vld [vmem:[%s178 + $0x1f8] sm:$0xff]
      %v320 = vunpack.c.l.b16 %v192
      %v321 = vunpack.c.h.b16 %v192
      %v322 = vunpack.c.l.b16 %v193
      %v323 = vunpack.c.h.b16 %v193
      %v324 = vunpack.c.l.b16 %v194
      %v325 = vunpack.c.h.b16 %v194
      %v326 = vunpack.c.l.b16 %v195
      %v327 = vunpack.c.h.b16 %v195
      %v328 = vunpack.c.l.b16 %v196
      %v329 = vunpack.c.h.b16 %v196
      %v330 = vunpack.c.l.b16 %v197
      %v331 = vunpack.c.h.b16 %v197
      %v332 = vunpack.c.l.b16 %v198
      %v333 = vunpack.c.h.b16 %v198
      %v334 = vunpack.c.l.b16 %v199
      %v335 = vunpack.c.h.b16 %v199
      %v336 = vunpack.c.l.b16 %v200
      %v337 = vunpack.c.h.b16 %v200
      %v338 = vunpack.c.l.b16 %v201
      %v339 = vunpack.c.h.b16 %v201
      %v340 = vunpack.c.l.b16 %v202
      %v341 = vunpack.c.h.b16 %v202
      %v342 = vunpack.c.l.b16 %v203
      %v343 = vunpack.c.h.b16 %v203
      %v344 = vunpack.c.l.b16 %v204
      %v345 = vunpack.c.h.b16 %v204
      %v346 = vunpack.c.l.b16 %v205
      %v347 = vunpack.c.h.b16 %v205
      %v348 = vunpack.c.l.b16 %v206
      %v349 = vunpack.c.h.b16 %v206
      %v350 = vunpack.c.l.b16 %v207
      %v351 = vunpack.c.h.b16 %v207
      %v352 = vunpack.c.l.b16 %v208
      %v353 = vunpack.c.h.b16 %v208
      %v354 = vunpack.c.l.b16 %v209
      %v355 = vunpack.c.h.b16 %v209
      %v356 = vunpack.c.l.b16 %v210
      %v357 = vunpack.c.h.b16 %v210
      %v358 = vunpack.c.l.b16 %v211
      %v359 = vunpack.c.h.b16 %v211
      %v360 = vunpack.c.l.b16 %v212
      %v361 = vunpack.c.h.b16 %v212
      %v362 = vunpack.c.l.b16 %v213
      %v363 = vunpack.c.h.b16 %v213
      %v364 = vunpack.c.l.b16 %v214
      %v365 = vunpack.c.h.b16 %v214
      %v366 = vunpack.c.l.b16 %v215
      %v367 = vunpack.c.h.b16 %v215
      %v368 = vunpack.c.l.b16 %v216
      %v369 = vunpack.c.h.b16 %v216
      %v370 = vunpack.c.l.b16 %v217
      %v371 = vunpack.c.h.b16 %v217
      %v372 = vunpack.c.l.b16 %v218
      %v373 = vunpack.c.h.b16 %v218
      %v374 = vunpack.c.l.b16 %v219
      %v375 = vunpack.c.h.b16 %v219
      %v376 = vunpack.c.l.b16 %v220
      %v377 = vunpack.c.h.b16 %v220
      %v378 = vunpack.c.l.b16 %v221
      %v379 = vunpack.c.h.b16 %v221
      %v380 = vunpack.c.l.b16 %v222
      %v381 = vunpack.c.h.b16 %v222
      %v382 = vunpack.c.l.b16 %v223
      %v383 = vunpack.c.h.b16 %v223
      %v384 = vunpack.c.l.b16 %v224
      %v385 = vunpack.c.h.b16 %v224
      %v386 = vunpack.c.l.b16 %v225
      %v387 = vunpack.c.h.b16 %v225
      %v388 = vunpack.c.l.b16 %v226
      %v389 = vunpack.c.h.b16 %v226
      %v390 = vunpack.c.l.b16 %v227
      %v391 = vunpack.c.h.b16 %v227
      %v392 = vunpack.c.l.b16 %v228
      %v393 = vunpack.c.h.b16 %v228
      %v394 = vunpack.c.l.b16 %v229
      %v395 = vunpack.c.h.b16 %v229
      %v396 = vunpack.c.l.b16 %v230
      %v397 = vunpack.c.h.b16 %v230
      %v398 = vunpack.c.l.b16 %v231
      %v399 = vunpack.c.h.b16 %v231
      %v400 = vunpack.c.l.b16 %v232
      %v401 = vunpack.c.h.b16 %v232
      %v402 = vunpack.c.l.b16 %v233
      %v403 = vunpack.c.h.b16 %v233
      %v404 = vunpack.c.l.b16 %v234
      %v405 = vunpack.c.h.b16 %v234
      %v406 = vunpack.c.l.b16 %v235
      %v407 = vunpack.c.h.b16 %v235
      %v408 = vunpack.c.l.b16 %v236
      %v409 = vunpack.c.h.b16 %v236
      %v410 = vunpack.c.l.b16 %v237
      %v411 = vunpack.c.h.b16 %v237
      %v412 = vunpack.c.l.b16 %v238
      %v413 = vunpack.c.h.b16 %v238
      %v414 = vunpack.c.l.b16 %v239
      %v415 = vunpack.c.h.b16 %v239
      %v416 = vunpack.c.l.b16 %v240
      %v417 = vunpack.c.h.b16 %v240
      %v418 = vunpack.c.l.b16 %v241
      %v419 = vunpack.c.h.b16 %v241
      %v420 = vunpack.c.l.b16 %v242
      %v421 = vunpack.c.h.b16 %v242
      %v422 = vunpack.c.l.b16 %v243
      %v423 = vunpack.c.h.b16 %v243
      %v424 = vunpack.c.l.b16 %v244
      %v425 = vunpack.c.h.b16 %v244
      %v426 = vunpack.c.l.b16 %v245
      %v427 = vunpack.c.h.b16 %v245
      %v428 = vunpack.c.l.b16 %v246
      %v429 = vunpack.c.h.b16 %v246
      %v430 = vunpack.c.l.b16 %v247
      %v431 = vunpack.c.h.b16 %v247
      %v432 = vunpack.c.l.b16 %v248
      %v433 = vunpack.c.h.b16 %v248
      %v434 = vunpack.c.l.b16 %v249
      %v435 = vunpack.c.h.b16 %v249
      %v436 = vunpack.c.l.b16 %v250
      %v437 = vunpack.c.h.b16 %v250
      %v438 = vunpack.c.l.b16 %v251
      %v439 = vunpack.c.h.b16 %v251
      %v440 = vunpack.c.l.b16 %v252
      %v441 = vunpack.c.h.b16 %v252
      %v442 = vunpack.c.l.b16 %v253
      %v443 = vunpack.c.h.b16 %v253
      %v444 = vunpack.c.l.b16 %v254
      %v445 = vunpack.c.h.b16 %v254
      %v446 = vunpack.c.l.b16 %v255
      %v447 = vunpack.c.h.b16 %v255
      %v448 = vpack.c.b16 %v328, %v320
      %v449 = vpack.c.b16 %v329, %v321
      %v450 = vpack.c.b16 %v330, %v322
      %v451 = vpack.c.b16 %v331, %v323
      %v452 = vpack.c.b16 %v332, %v324
      %v453 = vpack.c.b16 %v333, %v325
      %v454 = vpack.c.b16 %v334, %v326
      %v455 = vpack.c.b16 %v335, %v327
      %v456 = vpack.c.b16 %v344, %v336
      %v457 = vpack.c.b16 %v345, %v337
      %v458 = vpack.c.b16 %v346, %v338
      %v459 = vpack.c.b16 %v347, %v339
      %v460 = vpack.c.b16 %v348, %v340
      %v461 = vpack.c.b16 %v349, %v341
      %v462 = vpack.c.b16 %v350, %v342
      %v463 = vpack.c.b16 %v351, %v343
      %v464 = vpack.c.b16 %v360, %v352
      %v465 = vpack.c.b16 %v361, %v353
      %v466 = vpack.c.b16 %v362, %v354
      %v467 = vpack.c.b16 %v363, %v355
      %v468 = vpack.c.b16 %v364, %v356
      %v469 = vpack.c.b16 %v365, %v357
      %v470 = vpack.c.b16 %v366, %v358
      %v471 = vpack.c.b16 %v367, %v359
      %v472 = vpack.c.b16 %v376, %v368
      %v473 = vpack.c.b16 %v377, %v369
      %v474 = vpack.c.b16 %v378, %v370
      %v475 = vpack.c.b16 %v379, %v371
      %v476 = vpack.c.b16 %v380, %v372
      %v477 = vpack.c.b16 %v381, %v373
      %v478 = vpack.c.b16 %v382, %v374
      %v479 = vpack.c.b16 %v383, %v375
      %v480 = vpack.c.b16 %v392, %v384
      %v481 = vpack.c.b16 %v393, %v385
      %v482 = vpack.c.b16 %v394, %v386
      %v483 = vpack.c.b16 %v395, %v387
      %v484 = vpack.c.b16 %v396, %v388
      %v485 = vpack.c.b16 %v397, %v389
      %v486 = vpack.c.b16 %v398, %v390
      %v487 = vpack.c.b16 %v399, %v391
      %v488 = vpack.c.b16 %v408, %v400
      %v489 = vpack.c.b16 %v409, %v401
      %v490 = vpack.c.b16 %v410, %v402
      %v491 = vpack.c.b16 %v411, %v403
      %v492 = vpack.c.b16 %v412, %v404
      %v493 = vpack.c.b16 %v413, %v405
      %v494 = vpack.c.b16 %v414, %v406
      %v495 = vpack.c.b16 %v415, %v407
      %v496 = vpack.c.b16 %v424, %v416
      %v497 = vpack.c.b16 %v425, %v417
      %v498 = vpack.c.b16 %v426, %v418
      %v499 = vpack.c.b16 %v427, %v419
      %v500 = vpack.c.b16 %v428, %v420
      %v501 = vpack.c.b16 %v429, %v421
      %v502 = vpack.c.b16 %v430, %v422
      %v503 = vpack.c.b16 %v431, %v423
      %v504 = vpack.c.b16 %v440, %v432
      %v505 = vpack.c.b16 %v441, %v433
      %v506 = vpack.c.b16 %v442, %v434
      %v507 = vpack.c.b16 %v443, %v435
      %v508 = vpack.c.b16 %v444, %v436
      %v509 = vpack.c.b16 %v445, %v437
      %v510 = vpack.c.b16 %v446, %v438
      %v511 = vpack.c.b16 %v447, %v439
      %576 = vmatprep.subr.bf16.mxu0 %v505
      %577 = vmatpush1.bf16.msra.mxu0 %v504
      %578 = vmatprep.subr.bf16.mxu0 %v497
      %579 = vmatpush1.bf16.msra.mxu0 %v496
      %580 = vmatprep.subr.bf16.mxu0 %v489
      %581 = vmatpush1.bf16.msra.mxu0 %v488
      %582 = vmatprep.subr.bf16.mxu0 %v481
      %583 = vmatpush1.bf16.msra.mxu0 %v480
      %584 = vmatprep.subr.bf16.mxu0 %v473
      %585 = vmatpush1.bf16.msra.mxu0 %v472
      %586 = vmatprep.subr.bf16.mxu0 %v465
      %587 = vmatpush1.bf16.msra.mxu0 %v464
      %588 = vmatprep.subr.bf16.mxu0 %v457
      %589 = vmatpush1.bf16.msra.mxu0 %v456
      %590 = vmatprep.subr.bf16.mxu0 %v449
      %591 = vmatpush1.bf16.msra.mxu0 %v448
      %592 = vmatprep.subr.bf16.mxu0 0
      %593 = vmatpush2.bf16.msra.mxu0 0
      %594 = vmatprep.subr.bf16.mxu0 0
      %595 = vmatpush2.bf16.msra.mxu0 0
      %596 = vmatprep.subr.bf16.mxu0 0
      %597 = vmatpush2.bf16.msra.mxu0 0
      %598 = vmatprep.subr.bf16.mxu0 0
      %599 = vmatpush2.bf16.msra.mxu0 0
      %600 = vmatprep.subr.bf16.mxu0 0
      %601 = vmatpush2.bf16.msra.mxu0 0
      %602 = vmatprep.subr.bf16.mxu0 0
      %603 = vmatpush2.bf16.msra.mxu0 0
      %604 = vmatprep.subr.bf16.mxu0 0
      %605 = vmatpush2.bf16.msra.mxu0 0
      %606 = vmatprep.subr.bf16.mxu0 0
      %607 = vmatpush2.bf16.msra.mxu0 0
      %608 = vmatprep.mubr.bf16.mxu0 0
      %609 = vmatmul.mubr.bf16.gmra.mxu0 %v191
      %v610 = vpop.f32.mrf.mxu0
      %v611 = vadd.f32 0.0, %v610
      %v612 = vpop.f32.mrf.mxu0
      %v613 = vadd.f32 0.0, %v612
      %v614 = vpop.f32.mrf.mxu0
      %v615 = vpop.f32.mrf.mxu0
      %616 = vdwg.mxu0
      %617 = vmatprep.subr.bf16.mxu0 %v507
      %618 = vmatpush1.bf16.msra.mxu0 %v506
      %619 = vmatprep.subr.bf16.mxu0 %v499
      %620 = vmatpush1.bf16.msra.mxu0 %v498
      %621 = vmatprep.subr.bf16.mxu0 %v491
      %622 = vmatpush1.bf16.msra.mxu0 %v490
      %623 = vmatprep.subr.bf16.mxu0 %v483
      %624 = vmatpush1.bf16.msra.mxu0 %v482
      %625 = vmatprep.subr.bf16.mxu0 %v475
      %626 = vmatpush1.bf16.msra.mxu0 %v474
      %627 = vmatprep.subr.bf16.mxu0 %v467
      %628 = vmatpush1.bf16.msra.mxu0 %v466
      %629 = vmatprep.subr.bf16.mxu0 %v459
      %630 = vmatpush1.bf16.msra.mxu0 %v458
      %631 = vmatprep.subr.bf16.mxu0 %v451
      %632 = vmatpush1.bf16.msra.mxu0 %v450
      %633 = vmatprep.subr.bf16.mxu0 0
      %634 = vmatpush2.bf16.msra.mxu0 0
      %635 = vmatprep.subr.bf16.mxu0 0
      %636 = vmatpush2.bf16.msra.mxu0 0
      %637 = vmatprep.subr.bf16.mxu0 0
      %638 = vmatpush2.bf16.msra.mxu0 0
      %639 = vmatprep.subr.bf16.mxu0 0
      %640 = vmatpush2.bf16.msra.mxu0 0
      %641 = vmatprep.subr.bf16.mxu0 0
      %642 = vmatpush2.bf16.msra.mxu0 0
      %643 = vmatprep.subr.bf16.mxu0 0
      %644 = vmatpush2.bf16.msra.mxu0 0
      %645 = vmatprep.subr.bf16.mxu0 0
      %646 = vmatpush2.bf16.msra.mxu0 0
      %647 = vmatprep.subr.bf16.mxu0 0
      %648 = vmatpush2.bf16.msra.mxu0 0
      %649 = vmatprep.mubr.bf16.mxu0 0
      %650 = vmatmul.mubr.bf16.gmra.mxu0 %v191
      %v651 = vpop.f32.mrf.mxu0
      %v652 = vadd.f32 0.0, %v651
      %v653 = vpop.f32.mrf.mxu0
      %v654 = vadd.f32 0.0, %v653
      %v655 = vpop.f32.mrf.mxu0
      %v656 = vpop.f32.mrf.mxu0
      %657 = vdwg.mxu0
      %658 = vmatprep.subr.bf16.mxu0 %v509
      %659 = vmatpush1.bf16.msra.mxu0 %v508
      %660 = vmatprep.subr.bf16.mxu0 %v501
      %661 = vmatpush1.bf16.msra.mxu0 %v500
      %662 = vmatprep.subr.bf16.mxu0 %v493
      %663 = vmatpush1.bf16.msra.mxu0 %v492
      %664 = vmatprep.subr.bf16.mxu0 %v485
      %665 = vmatpush1.bf16.msra.mxu0 %v484
      %666 = vmatprep.subr.bf16.mxu0 %v477
      %667 = vmatpush1.bf16.msra.mxu0 %v476
      %668 = vmatprep.subr.bf16.mxu0 %v469
      %669 = vmatpush1.bf16.msra.mxu0 %v468
      %670 = vmatprep.subr.bf16.mxu0 %v461
      %671 = vmatpush1.bf16.msra.mxu0 %v460
      %672 = vmatprep.subr.bf16.mxu0 %v453
      %673 = vmatpush1.bf16.msra.mxu0 %v452
      %674 = vmatprep.subr.bf16.mxu0 0
      %675 = vmatpush2.bf16.msra.mxu0 0
      %676 = vmatprep.subr.bf16.mxu0 0
      %677 = vmatpush2.bf16.msra.mxu0 0
      %678 = vmatprep.subr.bf16.mxu0 0
      %679 = vmatpush2.bf16.msra.mxu0 0
      %680 = vmatprep.subr.bf16.mxu0 0
      %681 = vmatpush2.bf16.msra.mxu0 0
      %682 = vmatprep.subr.bf16.mxu0 0
      %683 = vmatpush2.bf16.msra.mxu0 0
      %684 = vmatprep.subr.bf16.mxu0 0
      %685 = vmatpush2.bf16.msra.mxu0 0
      %686 = vmatprep.subr.bf16.mxu0 0
      %687 = vmatpush2.bf16.msra.mxu0 0
      %688 = vmatprep.subr.bf16.mxu0 0
      %689 = vmatpush2.bf16.msra.mxu0 0
      %690 = vmatprep.mubr.bf16.mxu0 0
      %691 = vmatmul.mubr.bf16.gmra.mxu0 %v191
      %v692 = vpop.f32.mrf.mxu0
      %v693 = vadd.f32 0.0, %v692
      %v694 = vpop.f32.mrf.mxu0
      %v695 = vadd.f32 0.0, %v694
      %v696 = vpop.f32.mrf.mxu0
      %v697 = vpop.f32.mrf.mxu0
      %698 = vdwg.mxu0
      %699 = vmatprep.subr.bf16.mxu0 %v511
      %700 = vmatpush1.bf16.msra.mxu0 %v510
      %701 = vmatprep.subr.bf16.mxu0 %v503
      %702 = vmatpush1.bf16.msra.mxu0 %v502
      %703 = vmatprep.subr.bf16.mxu0 %v495
      %704 = vmatpush1.bf16.msra.mxu0 %v494
      %705 = vmatprep.subr.bf16.mxu0 %v487
      %706 = vmatpush1.bf16.msra.mxu0 %v486
      %707 = vmatprep.subr.bf16.mxu0 %v479
      %708 = vmatpush1.bf16.msra.mxu0 %v478
      %709 = vmatprep.subr.bf16.mxu0 %v471
      %710 = vmatpush1.bf16.msra.mxu0 %v470
      %711 = vmatprep.subr.bf16.mxu0 %v463
      %712 = vmatpush1.bf16.msra.mxu0 %v462
      %713 = vmatprep.subr.bf16.mxu0 %v455
      %714 = vmatpush1.bf16.msra.mxu0 %v454
      %715 = vmatprep.subr.bf16.mxu0 0
      %716 = vmatpush2.bf16.msra.mxu0 0
      %717 = vmatprep.subr.bf16.mxu0 0
      %718 = vmatpush2.bf16.msra.mxu0 0
      %719 = vmatprep.subr.bf16.mxu0 0
      %720 = vmatpush2.bf16.msra.mxu0 0
      %721 = vmatprep.subr.bf16.mxu0 0
      %722 = vmatpush2.bf16.msra.mxu0 0
      %723 = vmatprep.subr.bf16.mxu0 0
      %724 = vmatpush2.bf16.msra.mxu0 0
      %725 = vmatprep.subr.bf16.mxu0 0
      %726 = vmatpush2.bf16.msra.mxu0 0
      %727 = vmatprep.subr.bf16.mxu0 0
      %728 = vmatpush2.bf16.msra.mxu0 0
      %729 = vmatprep.subr.bf16.mxu0 0
      %730 = vmatpush2.bf16.msra.mxu0 0
      %731 = vmatprep.mubr.bf16.mxu0 0
      %732 = vmatmul.mubr.bf16.gmra.mxu0 %v191
      %v733 = vpop.f32.mrf.mxu0
      %v734 = vadd.f32 0.0, %v733
      %v735 = vpop.f32.mrf.mxu0
      %v736 = vadd.f32 0.0, %v735
      %v737 = vpop.f32.mrf.mxu0
      %v738 = vpop.f32.mrf.mxu0
      %739 = vdwg.mxu0
      %v748 = vcombine.low %v611, %v613
      %v749 = vcombine.low %v652, %v654
      %v750 = vcombine.low %v693, %v695
      %v751 = vcombine.low %v734, %v736
      %v753 = vunpack.c.l.s4 1966171168
      %v754 = vunpack.c.0.s8 %v753
      %v755 = vlaneseq
      %v756 = vshrl.u32 %v755, 7
      %v757 = vsub.s32 %v754, %v756
      %v758 = vrot.slane %v748, %v757
      %v760 = vunpack.c.l.s4 1966171168
      %v761 = vunpack.c.0.s8 %v760
      %v762 = vlaneseq
      %v763 = vshrl.u32 %v762, 7
      %v764 = vsub.s32 %v761, %v763
      %v765 = vrot.slane %v749, %v764
      %v767 = vunpack.c.l.s4 1966171168
      %v768 = vunpack.c.0.s8 %v767
      %v769 = vlaneseq
      %v770 = vshrl.u32 %v769, 7
      %v771 = vsub.s32 %v768, %v770
      %v772 = vrot.slane %v750, %v771
      %v774 = vunpack.c.l.s4 1966171168
      %v775 = vunpack.c.0.s8 %v774
      %v776 = vlaneseq
      %v777 = vshrl.u32 %v776, 7
      %v778 = vsub.s32 %v775, %v777
      %v779 = vrot.slane %v751, %v778
      %v780 = vcombine.low %v758, %v765
      %v781 = vcombine.low %v772, %v779
      %v783 = vunpack.c.l.s4 1966171168
      %v784 = vunpack.c.0.s8 %v783
      %v785 = vlaneseq
      %v786 = vshrl.u32 %v785, 7
      %v787 = vsub.s32 %v784, %v786
      %v788 = vrot.slane %v780, %v787
      %v790 = vunpack.c.l.s4 1966171168
      %v791 = vunpack.c.0.s8 %v790
      %v792 = vlaneseq
      %v793 = vshrl.u32 %v792, 7
      %v794 = vsub.s32 %v791, %v793
      %v795 = vrot.slane %v781, %v794
      %v796 = vcombine.low %v788, %v795
      %v798 = vadd.f32 %v190, %v796
      %799 = vst [vmem:[#allocation2] sm:$0xff] %v798
      // Predicated region
      $region33: #{g_forward.3} parent=27 // pred_check
        %p800 = pneg %p185
      $region34: #{g_forward.3} parent=27 // pred_check_branch
        %802 = sbr.rel (%p800) target = $region36
      $region35: #{g_forward.3} parent=27 // pred_region
        %v803 = vld [vmem:[#allocation2] sm:$0xff]
        %v804 = vadd.f32 %v803, 0.0
        %v805 = vmul.f32 %v803, %v803
        %v806 = vadd.f32 %v805, 0.0
        %808 = vrot.lane.b32.xlu0 %v804, 64
        %v809 = vpop.permute.xlu0 %808
        %v811 = vadd.f32 %v804, %v809
        %813 = vrot.lane.b32.xlu0 %v806, 64
        %v814 = vpop.permute.xlu0 %813
        %v816 = vadd.f32 %v806, %v814
        %v817 = vrot.slane %v804, 1
        %v819 = vadd.f32 %v811, %v817
        %v820 = vrot.slane %v806, 1
        %v822 = vadd.f32 %v816, %v820
        %v823 = vrot.slane %v809, 1
        %v825 = vadd.f32 %v819, %v823
        %v826 = vrot.slane %v814, 1
        %v828 = vadd.f32 %v822, %v826
        %v829 = vrot.slane %v804, 2
        %v831 = vadd.f32 %v825, %v829
        %v832 = vrot.slane %v806, 2
        %v834 = vadd.f32 %v828, %v832
        %v835 = vrot.slane %v809, 2
        %v837 = vadd.f32 %v831, %v835
        %v838 = vrot.slane %v814, 2
        %v840 = vadd.f32 %v834, %v838
        %v841 = vrot.slane %v804, 3
        %v843 = vadd.f32 %v837, %v841
        %v844 = vrot.slane %v806, 3
        %v846 = vadd.f32 %v840, %v844
        %v847 = vrot.slane %v809, 3
        %v849 = vadd.f32 %v843, %v847
        %v850 = vrot.slane %v814, 3
        %v852 = vadd.f32 %v846, %v850
        %v853 = vrot.slane %v804, 4
        %v855 = vadd.f32 %v849, %v853
        %v856 = vrot.slane %v806, 4
        %v858 = vadd.f32 %v852, %v856
        %v859 = vrot.slane %v809, 4
        %v861 = vadd.f32 %v855, %v859
        %v862 = vrot.slane %v814, 4
        %v864 = vadd.f32 %v858, %v862
        %v865 = vrot.slane %v804, 5
        %v867 = vadd.f32 %v861, %v865
        %v868 = vrot.slane %v806, 5
        %v870 = vadd.f32 %v864, %v868
        %v871 = vrot.slane %v809, 5
        %v873 = vadd.f32 %v867, %v871
        %v874 = vrot.slane %v814, 5
        %v876 = vadd.f32 %v870, %v874
        %v877 = vrot.slane %v804, 6
        %v879 = vadd.f32 %v873, %v877
        %v880 = vrot.slane %v806, 6
        %v882 = vadd.f32 %v876, %v880
        %v883 = vrot.slane %v809, 6
        %v885 = vadd.f32 %v879, %v883
        %v886 = vrot.slane %v814, 6
        %v888 = vadd.f32 %v882, %v886
        %v889 = vrot.slane %v804, 7
        %v891 = vadd.f32 %v885, %v889
        %v892 = vrot.slane %v806, 7
        %v894 = vadd.f32 %v888, %v892
        %v895 = vrot.slane %v809, 7
        %v897 = vadd.f32 %v891, %v895
        %v898 = vrot.slane %v814, 7
        %v900 = vadd.f32 %v894, %v898
        %v901 = vrcp.pop 16.0
        %v902 = vmul.f32 %v897, %v901
        %v903 = vmul.f32 %v900, %v901
        %v904 = vmul.f32 %v902, %v902
        %v905 = vsub.f32 %v903, %v904
        %v906 = vmax.f32 %v905, 0.0
        %v907 = vadd.f32 %v906, 1e-08
        %v908 = vrsqrt.pop %v907
        %v910 = vlaneseq
        %v911 = vshrl.u32 %v910, 7
        %v912 = vsub.s32 0, %v911
        %v913 = vrot.slane %v902, %v912
        %914 = vrot.lane.b32.xlu0 %v913, 64
        %v915 = vpop.permute.xlu0 %914
        %vm917 = vcmask 523264
        %v918 = vsel %vm917, %v902, %v915
        %v920 = vlaneseq
        %v921 = vshrl.u32 %v920, 7
        %v922 = vsub.s32 0, %v921
        %v923 = vrot.slane %v908, %v922
        %924 = vrot.lane.b32.xlu0 %v923, 64
        %v925 = vpop.permute.xlu0 %924
        %v927 = vsel %vm917, %v908, %v925
        %v929 = vcombine.low %v918, %v918
        %v931 = vunpack.c.l.s4 1966171168
        %v932 = vunpack.c.0.s8 %v931
        %v933 = vlaneseq
        %v934 = vshrl.u32 %v933, 7
        %v935 = vsub.s32 %v932, %v934
        %v936 = vrot.slane %v929, %v935
        %v937 = vcombine.low %v936, %v936
        %v939 = vunpack.c.l.s4 1966171168
        %v940 = vunpack.c.0.s8 %v939
        %v941 = vlaneseq
        %v942 = vshrl.u32 %v941, 7
        %v943 = vsub.s32 %v940, %v942
        %v944 = vrot.slane %v937, %v943
        %v945 = vcombine.low %v944, %v944
        %v947 = vsub.f32 %v803, %v945
        %v949 = vcombine.low %v927, %v927
        %v951 = vunpack.c.l.s4 1966171168
        %v952 = vunpack.c.0.s8 %v951
        %v953 = vlaneseq
        %v954 = vshrl.u32 %v953, 7
        %v955 = vsub.s32 %v952, %v954
        %v956 = vrot.slane %v949, %v955
        %v957 = vcombine.low %v956, %v956
        %v959 = vunpack.c.l.s4 1966171168
        %v960 = vunpack.c.0.s8 %v959
        %v961 = vlaneseq
        %v962 = vshrl.u32 %v961, 7
        %v963 = vsub.s32 %v960, %v962
        %v964 = vrot.slane %v957, %v963
        %v965 = vcombine.low %v964, %v964
        %v967 = vmul.f32 %v947, %v965
        %vm968 = vcmp.ge.f32.partialorder %v967, 0.0
        %v969 = vmul.f32 %v967, 0.2
        %v970 = vsel %vm968, %v967, %v969
        %v972 = vlaneseq
        %v973 = vshrl.u32 %v972, 7
        %v974 = vsub.s32 0, %v973
        %v975 = vrot.slane %v970, %v974
        %v976 = vlaneseq
        %v977 = vshrl.u32 %v976, 7
        %v978 = vsub.s32 1, %v977
        %v979 = vrot.slane %v970, %v978
        %v980 = vlaneseq
        %v981 = vshrl.u32 %v980, 7
        %v982 = vsub.s32 2, %v981
        %v983 = vrot.slane %v970, %v982
        %v984 = vlaneseq
        %v985 = vshrl.u32 %v984, 7
        %v986 = vsub.s32 3, %v985
        %v987 = vrot.slane %v970, %v986
        %v988 = vlaneseq
        %v989 = vshrl.u32 %v988, 7
        %v990 = vsub.s32 4, %v989
        %v991 = vrot.slane %v970, %v990
        %v992 = vlaneseq
        %v993 = vshrl.u32 %v992, 7
        %v994 = vsub.s32 5, %v993
        %v995 = vrot.slane %v970, %v994
        %v996 = vlaneseq
        %v997 = vshrl.u32 %v996, 7
        %v998 = vsub.s32 6, %v997
        %v999 = vrot.slane %v970, %v998
        %v1000 = vlaneseq
        %v1001 = vshrl.u32 %v1000, 7
        %v1002 = vsub.s32 7, %v1001
        %v1003 = vrot.slane %v970, %v1002
        %v1012 = vpack.c.bf16 %v975, %v975
        %v1013 = vpack.c.bf16 %v979, %v979
        %v1014 = vpack.c.bf16 %v983, %v983
        %v1015 = vpack.c.bf16 %v987, %v987
        %v1016 = vpack.c.bf16 %v991, %v991
        %v1017 = vpack.c.bf16 %v995, %v995
        %v1018 = vpack.c.bf16 %v999, %v999
        %v1019 = vpack.c.bf16 %v1003, %v1003
        %v1028 = vcombine.low %v1012, %v1013
        %v1029 = vcombine.low %v1014, %v1015
        %v1030 = vcombine.low %v1016, %v1017
        %v1031 = vcombine.low %v1018, %v1019
        %v1033 = vunpack.c.l.s4 1966171168
        %v1034 = vunpack.c.0.s8 %v1033
        %v1035 = vlaneseq
        %v1036 = vshrl.u32 %v1035, 7
        %v1037 = vsub.s32 %v1034, %v1036
        %v1038 = vrot.slane %v1028, %v1037
        %v1040 = vunpack.c.l.s4 1966171168
        %v1041 = vunpack.c.0.s8 %v1040
        %v1042 = vlaneseq
        %v1043 = vshrl.u32 %v1042, 7
        %v1044 = vsub.s32 %v1041, %v1043
        %v1045 = vrot.slane %v1029, %v1044
        %v1047 = vunpack.c.l.s4 1966171168
        %v1048 = vunpack.c.0.s8 %v1047
        %v1049 = vlaneseq
        %v1050 = vshrl.u32 %v1049, 7
        %v1051 = vsub.s32 %v1048, %v1050
        %v1052 = vrot.slane %v1030, %v1051
        %v1054 = vunpack.c.l.s4 1966171168
        %v1055 = vunpack.c.0.s8 %v1054
        %v1056 = vlaneseq
        %v1057 = vshrl.u32 %v1056, 7
        %v1058 = vsub.s32 %v1055, %v1057
        %v1059 = vrot.slane %v1031, %v1058
        %v1060 = vcombine.low %v1038, %v1045
        %v1061 = vcombine.low %v1052, %v1059
        %v1063 = vunpack.c.l.s4 1966171168
        %v1064 = vunpack.c.0.s8 %v1063
        %v1065 = vlaneseq
        %v1066 = vshrl.u32 %v1065, 7
        %v1067 = vsub.s32 %v1064, %v1066
        %v1068 = vrot.slane %v1060, %v1067
        %v1070 = vunpack.c.l.s4 1966171168
        %v1071 = vunpack.c.0.s8 %v1070
        %v1072 = vlaneseq
        %v1073 = vshrl.u32 %v1072, 7
        %v1074 = vsub.s32 %v1071, %v1073
        %v1075 = vrot.slane %v1061, %v1074
        %v1076 = vcombine.low %v1068, %v1075
        %vm1078 = vcmask 1040384
        %vm1079 = vsmask.f32 256
        %vm1080 = vmand %vm1078, %vm1079
        %vm1081 = vcmask 1041409
        %vm1082 = vsmask.f32 1280
        %vm1083 = vmand %vm1081, %vm1082
        %vm1084 = vmor %vm1083, %vm1080
        %vm1085 = vcmask 1042434
        %vm1086 = vsmask.f32 2304
        %vm1087 = vmand %vm1085, %vm1086
        %vm1088 = vmor %vm1087, %vm1084
        %vm1089 = vcmask 1043459
        %vm1090 = vsmask.f32 3328
        %vm1091 = vmand %vm1089, %vm1090
        %vm1092 = vmor %vm1091, %vm1088
        %vm1093 = vcmask 1044484
        %vm1094 = vsmask.f32 4352
        %vm1095 = vmand %vm1093, %vm1094
        %vm1096 = vmor %vm1095, %vm1092
        %vm1097 = vcmask 1045509
        %vm1098 = vsmask.f32 5376
        %vm1099 = vmand %vm1097, %vm1098
        %vm1100 = vmor %vm1099, %vm1096
        %vm1101 = vcmask 1046534
        %vm1102 = vsmask.f32 6400
        %vm1103 = vmand %vm1101, %vm1102
        %vm1104 = vmor %vm1103, %vm1100
        %vm1105 = vcmask 1047559
        %vm1106 = vsmask.f32 7424
        %vm1107 = vmand %vm1105, %vm1106
        %vm1108 = vmor %vm1107, %vm1104
        %v1109 = vld [vmem:[%s183] sm:$0xff]
        %v1110 = vsel %vm1108, %v1076, %v1109
        %1111 = vst [vmem:[%s183] sm:$0xff] %v1110
      $region36: #{g_forward.3} parent=27 // pred_fallthru
        _
      %p1112 = scmp.lt.s32.totalorder %s17, 1
      %s1113 = scalar_select %p1112, %s17, 1
      %s1114 = smul.addr %s1113, 8
      %s1115 = scalar_lea.vmem %s2, %s1114
      // Predicated region
      $region37: #{g_forward.3} parent=27 // pred_check
        %p1116 = pneg %p97
      $region38: #{g_forward.3} parent=27 // pred_check_branch
        %1118 = sbr.rel (%p1116) target = $region40
      $region39: #{g_forward.3} parent=27 // pred_region
        _
      $region40: #{g_forward.3} parent=27 // pred_fallthru
        _
    $region28: #{g_forward.3} parent=5 // pred_fallthru
      _
    %p1119 = scmp.le.s32.totalorder 2, %s8
    // Predicated region
    $region41: #{g_forward.3} parent=5 // pred_check
      %p1120 = pneg %p1119
    $region42: #{g_forward.3} parent=5 // pred_check_branch
      %1122 = sbr.rel (%p1120) target = $region44
    $region43: #{g_forward.3} parent=5 // pred_region
      %s1123 = ssub.s32 %s8, 2
      // Predicated region
      $region45: #{g_forward.3} parent=43 // pred_check
        %p1124 = pneg %p103
      $region46: #{g_forward.3} parent=43 // pred_check_branch
        %1126 = sbr.rel (%p1124) target = $region48
      $region47: #{g_forward.3} parent=43 // pred_region
        %p1127 = scmp.lt.s32.totalorder %s19, 1
        %s1128 = scalar_select %p1127, %s19, 1
        %s1129 = smul.addr %s1128, 8
        %s1130 = scalar_lea.vmem %s2, %s1129
      $region48: #{g_forward.3} parent=43 // pred_fallthru
        _
    $region44: #{g_forward.3} parent=5 // pred_fallthru
      _
  $region6: #{g_forward.3} parent=0 // loop_footer
    %s12 = sadd.s32 1, %s8
  $region7: #{g_forward.3} parent=0 // loop_footer_branch
    %7 = sbr.rel target = $region3
  $region8: #{g_forward.3} parent=0 // loop_exit
    _

// kernel: g_forward.4
$region0: #{g_forward.4}
  #allocation0 [shape = 'u32[]', space=smem, size = 0x4, offset = 0x4, fixed_abs, tag = 'smem constant byte address 0x4 - core index']
  #allocation1 [shape = 'u32[144,128]{1,0:T(1,128)}', space=vmem, size = 0x12000, scoped, tag = 'internal scratch']
  #allocation2 [shape = 'f32[16,128]{1,0:T(8,128)}', space=vmem, size = 0x2000, scoped, tag = 'scratch operand']
  %s0 = inlined_call_operand.vmem [shape: bf16[2,16,640], index: 0, kind: input, shape index: {}]
  %s1 = inlined_call_operand.vmem [shape: bf16[640,128], index: 1, kind: input, shape index: {}]
  %s2 = inlined_call_operand.vmem [shape: bf16[2,16,128], index: 2, kind: output, shape index: {}]
  %s3 = sld [smem:[#allocation0]]
  $region90: #{g_forward.4} parent=0
    _
  %s5 = ssub.s32 1, %s3
  %s6 = scalar_select 0, %s5, %s3
  $region1: #{g_forward.4} parent=0
    #allocation3 [shape = 'u8[8192]{0}', space=vmem, size = 0x2000, scoped, tag = 'input window, operand 0']
    loop: start=0, step=1, limit=12
    $region2: #{g_forward.4} parent=1 // loop_pre_header
      _
    $region3: #{g_forward.4} parent=1 // loop_header
      %s8 = sphi 0, %s12
      %p9 = scmp.ge.s32.totalorder %s8, 12
      %s15 = sphi 0, %s27
      %s16 = sphi 0, %s23
      %s17 = sphi 0, %s15
      %s18 = sphi 0, %s16
      %s19 = sphi 0, %s17
      %s20 = sphi 0, %s18
      %s32 = sphi 0, %s34
      %s35 = sphi 0, %s32
      %s36 = sphi 0, %s35
      %s52 = sphi 0, %s36
      %s58 = sphi 0, %s60
      %s61 = sphi 0, %s58
      %s62 = sphi 0, %s61
      %s78 = sphi 0, %s62
      %s84 = sphi 0, %s86
      %s87 = sphi 0, %s84
      %s88 = sphi 0, %s87
      %s104 = sphi 0, %s88
    $region4: #{g_forward.4} parent=1 // loop_header_branch
      %11 = sbr.rel (%p9) target = $region8
    $region5: #{g_forward.4} parent=1 // loop_body
      %s13 = ssub.s32 %s8, 1
      %s14 = ssub.s32 %s8, 2
      %s21 = sadd.s32 1, %s16
      %p22 = scmp.ge.s32.totalorder %s21, 5
      %s23 = scalar_select %p22, 0, %s21
      %s24 = sadd.s32 1, %s15
      %s25 = scalar_select %p22, %s24, %s15
      %p26 = scmp.ge.s32.totalorder %s25, 2
      %s27 = scalar_select %p26, 0, %s25
      %s28 = ssub.s32 %s15, %s27
      %s29 = ssub.s32 %s16, %s23
      %s30 = sor.u32 %s28, %s29
      %p31 = scmp.eq.s32.totalorder %s30, 0
      %s33 = sadd.s32 %s32, 1
      %s34 = scalar_select %p31, %s32, %s33
      %p37 = pneg %p31
      %p38 = scmp.eq.s32.totalorder %s8, 9
      %p39 = por %p37, %p38
      %p40 = scmp.ne.s32.totalorder %s32, %s35
      %p41 = scmp.eq.s32.totalorder %s8, 0
      %p42 = por %p40, %p41
      %p43 = scmp.ne.s32.totalorder %s32, %s35
      %p44 = scmp.eq.s32.totalorder %s13, 9
      %p45 = por %p43, %p44
      %p46 = scmp.ne.s32.totalorder %s35, %s36
      %p47 = scmp.eq.s32.totalorder %s13, 0
      %p48 = por %p46, %p47
      %p49 = scmp.ne.s32.totalorder %s35, %s36
      %p50 = scmp.eq.s32.totalorder %s14, 9
      %p51 = por %p49, %p50
      %p53 = scmp.ne.s32.totalorder %s36, %s52
      %p54 = scmp.eq.s32.totalorder %s14, 0
      %p55 = por %p53, %p54
      %s56 = ssub.s32 %s16, %s23
      %p57 = scmp.eq.s32.totalorder %s56, 0
      %s59 = sadd.s32 %s58, 1
      %s60 = scalar_select %p57, %s58, %s59
      %p63 = pneg %p57
      %p64 = scmp.eq.s32.totalorder %s8, 9
      %p65 = por %p63, %p64
      %p66 = scmp.ne.s32.totalorder %s58, %s61
      %p67 = scmp.eq.s32.totalorder %s8, 0
      %p68 = por %p66, %p67
      %p69 = scmp.ne.s32.totalorder %s58, %s61
      %p70 = scmp.eq.s32.totalorder %s13, 9
      %p71 = por %p69, %p70
      %p72 = scmp.ne.s32.totalorder %s61, %s62
      %p73 = scmp.eq.s32.totalorder %s13, 0
      %p74 = por %p72, %p73
      %p75 = scmp.ne.s32.totalorder %s61, %s62
      %p76 = scmp.eq.s32.totalorder %s14, 9
      %p77 = por %p75, %p76
      %p79 = scmp.ne.s32.totalorder %s62, %s78
      %p80 = scmp.eq.s32.totalorder %s14, 0
      %p81 = por %p79, %p80
      %s82 = ssub.s32 %s15, %s27
      %p83 = scmp.eq.s32.totalorder %s82, 0
      %s85 = sadd.s32 %s84, 1
      %s86 = scalar_select %p83, %s84, %s85
      %p89 = pneg %p83
      %p90 = scmp.eq.s32.totalorder %s8, 9
      %p91 = por %p89, %p90
      %p92 = scmp.ne.s32.totalorder %s84, %s87
      %p93 = scmp.eq.s32.totalorder %s8, 0
      %p94 = por %p92, %p93
      %p95 = scmp.ne.s32.totalorder %s84, %s87
      %p96 = scmp.eq.s32.totalorder %s13, 9
      %p97 = por %p95, %p96
      %p98 = scmp.ne.s32.totalorder %s87, %s88
      %p99 = scmp.eq.s32.totalorder %s13, 0
      %p100 = por %p98, %p99
      %p101 = scmp.ne.s32.totalorder %s87, %s88
      %p102 = scmp.eq.s32.totalorder %s14, 9
      %p103 = por %p101, %p102
      %p105 = scmp.ne.s32.totalorder %s88, %s104
      %p106 = scmp.eq.s32.totalorder %s14, 0
      %p107 = por %p105, %p106
      %p108 = scmp.le.s32.totalorder 1, %s8
      %p109 = scmp.lt.s32.totalorder %s8, 11
      %p110 = pnand %p108, %p109
      %p111 = pneg %p110
      // Predicated region
      $region9: #{g_forward.4} parent=5 // pred_check
        _
      $region10: #{g_forward.4} parent=5 // pred_check_branch
        %113 = sbr.rel (%p110) target = $region12
      $region11: #{g_forward.4} parent=5 // pred_region
        %s114 = ssub.s32 %s8, 1
      $region12: #{g_forward.4} parent=5 // pred_fallthru
        _
      %p115 = scmp.lt.s32.totalorder %s8, 10
      // Predicated region
      $region13: #{g_forward.4} parent=5 // pred_check
        %p116 = pneg %p115
      $region14: #{g_forward.4} parent=5 // pred_check_branch
        %118 = sbr.rel (%p116) target = $region16
      $region15: #{g_forward.4} parent=5 // pred_region
        // Predicated region
        $region17: #{g_forward.4} parent=15 // pred_check
          %p119 = pneg %p42
        $region18: #{g_forward.4} parent=15 // pred_check_branch
          %121 = sbr.rel (%p119) target = $region20
        $region19: #{g_forward.4} parent=15 // pred_region
          %s122 = sand.u32 %s32, 1
          %s123 = sand.u32 %s32, 1
          %s124 = smul.addr %s123, 8
          %s125 = scalar_lea.vmem [#allocation3], %s124
          %s126 = smul.addr %s15, 10
          %s127 = sadd.s32 %s16, %s126
          %s128 = smul.addr %s127, 4
          %s129 = scalar_lea.vmem %s0, %s128
          // Predicated region
          $region21: #{g_forward.4} parent=19 // pred_check
            _
          $region22: #{g_forward.4} parent=19 // pred_check_branch
            %131 = sbr.rel (0) target = $region24
          $region23: #{g_forward.4} parent=19 // pred_region
            // Predicated region
            $region25: #{g_forward.4} parent=23 // pred_check
              _
            $region26: #{g_forward.4} parent=23 // pred_check_branch
              %133 = sbr.rel target = $region28
            $region27: #{g_forward.4} parent=23 // pred_region
              // Predicated region
              $region40: #{g_forward.4} parent=27 // pred_check
                _
              $region41: #{g_forward.4} parent=27 // pred_check_branch
                %151 = sbr.rel (0) target = $region43
              $region42: #{g_forward.4} parent=27 // pred_region
                loop: start=0, step=1, limit=1
                $region44: #{g_forward.4} parent=42 // loop_pre_header
                  _
                $region45: #{g_forward.4} parent=42 // loop_header
                  %s153 = sphi 0, %s157
                  %p154 = scmp.ge.s32.totalorder %s153, 1
                  %s158 = sphi %s129, %s129
                  %s159 = sphi %s125, %s125
                $region46: #{g_forward.4} parent=42 // loop_header_branch
                  %156 = sbr.rel (%p154) target = $region50
                $region47: #{g_forward.4} parent=42 // loop_body
                  _
                $region48: #{g_forward.4} parent=42 // loop_footer
                  %s157 = sadd.s32 1, %s153
                $region49: #{g_forward.4} parent=42 // loop_footer_branch
                  %152 = sbr.rel target = $region45
                $region50: #{g_forward.4} parent=42 // loop_exit
                  _
                %s161 = ssub.s32 16, 1
                loop: start=0, step=1, limit=1
                $region51: #{g_forward.4} parent=42 // loop_pre_header
                  _
                $region52: #{g_forward.4} parent=42 // loop_header
                  %s163 = sphi 0, %s167
                  %p164 = scmp.ge.s32.totalorder %s163, 1
                  %s168 = sphi %s129, %s129
                  %s169 = sphi %s125, %s125
                $region53: #{g_forward.4} parent=42 // loop_header_branch
                  %166 = sbr.rel (%p164) target = $region57
                $region54: #{g_forward.4} parent=42 // loop_body
                  %v170 = vld [vmem:[%s168] sm:%s161]
                  %171 = vst [vmem:[%s169] sm:%s161] %v170
                  %v172 = vld [vmem:[%s168 + $0x14] sm:%s161]
                  %173 = vst [vmem:[%s169 + $0x4] sm:%s161] %v172
                $region55: #{g_forward.4} parent=42 // loop_footer
                  %s167 = sadd.s32 1, %s163
                $region56: #{g_forward.4} parent=42 // loop_footer_branch
                  %162 = sbr.rel target = $region52
                $region57: #{g_forward.4} parent=42 // loop_exit
                  _
              $region43: #{g_forward.4} parent=27 // pred_fallthru
                _
            $region28: #{g_forward.4} parent=23 // pred_fallthru
              _
            // Predicated region
            $region29: #{g_forward.4} parent=23 // pred_check
              _
            $region30: #{g_forward.4} parent=23 // pred_check_branch
              %135 = sbr.rel (0) target = $region32
            $region31: #{g_forward.4} parent=23 // pred_region
              %s137 = ssub.s32 16, 1
              loop: start=0, step=1, limit=1
              $region33: #{g_forward.4} parent=31 // loop_pre_header
                _
              $region34: #{g_forward.4} parent=31 // loop_header
                %s139 = sphi 0, %s143
                %p140 = scmp.ge.s32.totalorder %s139, 1
                %s144 = sphi %s129, %s129
                %s145 = sphi %s125, %s125
              $region35: #{g_forward.4} parent=31 // loop_header_branch
                %142 = sbr.rel (%p140) target = $region39
              $region36: #{g_forward.4} parent=31 // loop_body
                %v146 = vld [vmem:[%s144] sm:%s137]
                %147 = vst [vmem:[%s145] sm:%s137] %v146
                %v148 = vld [vmem:[%s144 + $0x14] sm:%s137]
                %149 = vst [vmem:[%s145 + $0x4] sm:%s137] %v148
              $region37: #{g_forward.4} parent=31 // loop_footer
                %s143 = sadd.s32 1, %s139
              $region38: #{g_forward.4} parent=31 // loop_footer_branch
                %138 = sbr.rel target = $region34
              $region39: #{g_forward.4} parent=31 // loop_exit
                _
            $region32: #{g_forward.4} parent=23 // pred_fallthru
              _
          $region24: #{g_forward.4} parent=19 // pred_fallthru
            _
          %174 = vnop
        $region20: #{g_forward.4} parent=15 // pred_fallthru
          _
        // Predicated region
        $region58: #{g_forward.4} parent=15 // pred_check
          %p175 = pneg %p68
        $region59: #{g_forward.4} parent=15 // pred_check_branch
          %177 = sbr.rel (%p175) target = $region61
        $region60: #{g_forward.4} parent=15 // pred_region
          %s178 = smul.u32 16, %s16
          %p179 = scmp.lt.s32.totalorder %s178, 79
          %s180 = scalar_select %p179, %s178, 79
          %s181 = smul.addr %s180, 4
          %s182 = scalar_lea.vmem %s1, %s181
          %s183 = smul.u32 16, %s16
        $region61: #{g_forward.4} parent=15 // pred_fallthru
          _
      $region16: #{g_forward.4} parent=5 // pred_fallthru
        _
      %p184 = scmp.le.s32.totalorder 1, %s8
      %p185 = scmp.lt.s32.totalorder %s8, 11
      %p186 = pnand %p184, %p185
      %p187 = pneg %p186
      // Predicated region
      $region62: #{g_forward.4} parent=5 // pred_check
        _
      $region63: #{g_forward.4} parent=5 // pred_check_branch
        %189 = sbr.rel (%p186) target = $region65
      $region64: #{g_forward.4} parent=5 // pred_region
        %s190 = ssub.s32 %s8, 1
        %s191 = sand.u32 %s35, 1
        %s192 = sand.u32 %s35, 1
        %s193 = smul.addr %s192, 8
        %s194 = scalar_lea.vmem [#allocation3], %s193
        // Predicated region
        $region66: #{g_forward.4} parent=64 // pred_check
          %p195 = pneg %p48
        $region67: #{g_forward.4} parent=64 // pred_check_branch
          %197 = sbr.rel (%p195) target = $region69
        $region68: #{g_forward.4} parent=64 // pred_region
          _
        $region69: #{g_forward.4} parent=64 // pred_fallthru
          _
        %s198 = sand.u32 %s35, 1
        %s199 = sand.u32 %s35, 1
        %s200 = smul.addr %s199, 8
        %s201 = scalar_lea.vmem [#allocation3], %s200
        %p202 = pneg %p48
        %p203 = pneg %p45
        %s204 = smul.u32 16, %s18
        %p205 = scmp.lt.s32.totalorder %s204, 79
        %s206 = scalar_select %p205, %s204, 79
        %s207 = smul.addr %s206, 4
        %s208 = scalar_lea.vmem %s1, %s207
        %p209 = pneg %p74
        %p210 = pneg %p71
        %p211 = pneg %p100
        %p212 = pneg %p97
        %p213 = scmp.lt.s32.totalorder %s17, 1
        %s214 = scalar_select %p213, %s17, 1
        %s215 = smul.addr %s214, 2
        %s216 = smul.addr %s215, 4
        %s217 = scalar_lea.vmem %s2, %s216
        %s218 = smul.u32 16, %s18
        %p219 = scmp.lt.s32.totalorder %s218, 79
        %s220 = scalar_select %p219, %s218, 79
        %s221 = smul.addr %s220, 4
        %s222 = scalar_lea.vmem %s1, %s221
        %s223 = smul.u32 16, %s18
        %p224 = scmp.lt.s32.totalorder %s17, 1
        %s225 = scalar_select %p224, %s17, 1
        %s226 = smul.addr %s225, 2
        %s227 = smul.addr %s226, 4
        %s228 = scalar_lea.vmem %s2, %s227
        %p230 = scmp.eq.s32.totalorder %s18, 0
        // Predicated region
        $region70: #{g_forward.4} parent=64 // pred_check
          %p231 = pneg %p230
        $region71: #{g_forward.4} parent=64 // pred_check_branch
          %233 = sbr.rel (%p231) target = $region73
        $region72: #{g_forward.4} parent=64 // pred_region
          %234 = vst [vmem:[#allocation2] sm:$0xff] 0.0
          %235 = vst [vmem:[#allocation2 + $0x8] sm:$0xff] 0.0
        $region73: #{g_forward.4} parent=64 // pred_fallthru
          _
        %v236 = vld [vmem:[#allocation2] sm:$0xff]
        %v237 = vld [vmem:[#allocation2 + $0x8] sm:$0xff]
        %v238 = vld [vmem:[%s194] sm:$0xf]
        %v239 = vld [vmem:[%s194 + $0x4] sm:$0xf]
        %v240 = vld [vmem:[%s222] sm:$0xf]
        %v241 = vld [vmem:[%s222 + $0x4] sm:$0xf]
        %v242 = vld [vmem:[%s222 + $0x8] sm:$0xf]
        %v243 = vld [vmem:[%s222 + $0xc] sm:$0xf]
        %v244 = vld [vmem:[%s222 + $0x10] sm:$0xf]
        %v245 = vld [vmem:[%s222 + $0x14] sm:$0xf]
        %v246 = vld [vmem:[%s222 + $0x18] sm:$0xf]
        %v247 = vld [vmem:[%s222 + $0x1c] sm:$0xf]
        %v248 = vld [vmem:[%s222 + $0x20] sm:$0xf]
        %v249 = vld [vmem:[%s222 + $0x24] sm:$0xf]
        %v250 = vld [vmem:[%s222 + $0x28] sm:$0xf]
        %v251 = vld [vmem:[%s222 + $0x2c] sm:$0xf]
        %v252 = vld [vmem:[%s222 + $0x30] sm:$0xf]
        %v253 = vld [vmem:[%s222 + $0x34] sm:$0xf]
        %v254 = vld [vmem:[%s222 + $0x38] sm:$0xf]
        %v255 = vld [vmem:[%s222 + $0x3c] sm:$0xf]
        %v258 = vunpack.c.l.b16 %v238
        %v259 = vunpack.c.l.b16 %v239
        %v260 = vpack.c.b16 %v259, %v258
        %v278 = vunpack.c.l.b16 %v240
        %v279 = vunpack.c.l.b16 %v241
        %v280 = vunpack.c.l.b16 %v242
        %v281 = vunpack.c.l.b16 %v243
        %v282 = vunpack.c.l.b16 %v244
        %v283 = vunpack.c.l.b16 %v245
        %v284 = vunpack.c.l.b16 %v246
        %v285 = vunpack.c.l.b16 %v247
        %v286 = vunpack.c.l.b16 %v248
        %v287 = vunpack.c.l.b16 %v249
        %v288 = vunpack.c.l.b16 %v250
        %v289 = vunpack.c.l.b16 %v251
        %v290 = vunpack.c.l.b16 %v252
        %v291 = vunpack.c.l.b16 %v253
        %v292 = vunpack.c.l.b16 %v254
        %v293 = vunpack.c.l.b16 %v255
        %v294 = vpack.c.b16 %v279, %v278
        %v295 = vpack.c.b16 %v281, %v280
        %v296 = vpack.c.b16 %v283, %v282
        %v297 = vpack.c.b16 %v285, %v284
        %v298 = vpack.c.b16 %v287, %v286
        %v299 = vpack.c.b16 %v289, %v288
        %v300 = vpack.c.b16 %v291, %v290
        %v301 = vpack.c.b16 %v293, %v292
        %310 = vmatprep.subr.bf16.mxu0 0
        %311 = vmatpush1.bf16.msra.mxu0 %v301
        %312 = vmatprep.subr.bf16.mxu0 0
        %313 = vmatpush1.bf16.msra.mxu0 %v300
        %314 = vmatprep.subr.bf16.mxu0 0
        %315 = vmatpush1.bf16.msra.mxu0 %v299
        %316 = vmatprep.subr.bf16.mxu0 0
        %317 = vmatpush1.bf16.msra.mxu0 %v298
        %318 = vmatprep.subr.bf16.mxu0 0
        %319 = vmatpush1.bf16.msra.mxu0 %v297
        %320 = vmatprep.subr.bf16.mxu0 0
        %321 = vmatpush1.bf16.msra.mxu0 %v296
        %322 = vmatprep.subr.bf16.mxu0 0
        %323 = vmatpush1.bf16.msra.mxu0 %v295
        %324 = vmatprep.subr.bf16.mxu0 0
        %325 = vmatpush1.bf16.msra.mxu0 %v294
        %326 = vmatprep.subr.bf16.mxu0 0
        %327 = vmatpush2.bf16.msra.mxu0 0
        %328 = vmatprep.subr.bf16.mxu0 0
        %329 = vmatpush2.bf16.msra.mxu0 0
        %330 = vmatprep.subr.bf16.mxu0 0
        %331 = vmatpush2.bf16.msra.mxu0 0
        %332 = vmatprep.subr.bf16.mxu0 0
        %333 = vmatpush2.bf16.msra.mxu0 0
        %334 = vmatprep.subr.bf16.mxu0 0
        %335 = vmatpush2.bf16.msra.mxu0 0
        %336 = vmatprep.subr.bf16.mxu0 0
        %337 = vmatpush2.bf16.msra.mxu0 0
        %338 = vmatprep.subr.bf16.mxu0 0
        %339 = vmatpush2.bf16.msra.mxu0 0
        %340 = vmatprep.subr.bf16.mxu0 0
        %341 = vmatpush2.bf16.msra.mxu0 0
        %342 = vmatprep.mubr.bf16.mxu0 0
        %343 = vmatmul.mubr.bf16.gmra.mxu0 %v260
        %v344 = vpop.f32.mrf.mxu0
        %v345 = vadd.f32 0.0, %v344
        %v346 = vpop.f32.mrf.mxu0
        %v347 = vpop.f32.mrf.mxu0
        %v348 = vadd.f32 0.0, %v347
        %v349 = vpop.f32.mrf.mxu0
        %350 = vdwg.mxu0
        %v351 = vadd.f32 %v236, %v345
        %v352 = vadd.f32 %v237, %v348
        %353 = vst [vmem:[#allocation2] sm:$0xff] %v351
        %354 = vst [vmem:[#allocation2 + $0x8] sm:$0xff] %v352
        %p355 = scmp.eq.s32.totalorder %s18, 4
        // Predicated region
        $region74: #{g_forward.4} parent=64 // pred_check
          %p356 = pneg %p355
        $region75: #{g_forward.4} parent=64 // pred_check_branch
          %358 = sbr.rel (%p356) target = $region77
        $region76: #{g_forward.4} parent=64 // pred_region
          %v359 = vld [vmem:[#allocation2] sm:$0xff]
          %v360 = vld [vmem:[#allocation2 + $0x8] sm:$0xff]
          %v361 = vadd.f32 %v359, %v360
          %v362 = vrot.slane %v361, 4
          %v363 = vadd.f32 %v361, %v362
          %v364 = vrot.slane %v363, 2
          %v365 = vadd.f32 %v363, %v364
          %v366 = vrot.slane %v365, 1
          %v367 = vadd.f32 %v365, %v366
          %v368 = vmul.f32 %v359, %v359
          %v369 = vmul.f32 %v360, %v360
          %v370 = vadd.f32 %v368, %v369
          %v371 = vrot.slane %v370, 4
          %v372 = vadd.f32 %v370, %v371
          %v373 = vrot.slane %v372, 2
          %v374 = vadd.f32 %v372, %v373
          %v375 = vrot.slane %v374, 1
          %v376 = vadd.f32 %v374, %v375
          %378 = vrot.lane.b32.xlu0 %v367, 96
          %v379 = vpop.permute.xlu0 %378
          %v381 = vadd.f32 %v367, %v379
          %383 = vrot.lane.b32.xlu0 %v376, 96
          %v384 = vpop.permute.xlu0 %383
          %v386 = vadd.f32 %v376, %v384
          %387 = vrot.lane.b32.xlu0 %v367, 64
          %v388 = vpop.permute.xlu0 %387
          %v390 = vadd.f32 %v381, %v388
          %391 = vrot.lane.b32.xlu0 %v376, 64
          %v392 = vpop.permute.xlu0 %391
          %v394 = vadd.f32 %v386, %v392
          %395 = vrot.lane.b32.xlu0 %v367, 32
          %v396 = vpop.permute.xlu0 %395
          %v398 = vadd.f32 %v390, %v396
          %399 = vrot.lane.b32.xlu0 %v376, 32
          %v400 = vpop.permute.xlu0 %399
          %v402 = vadd.f32 %v394, %v400
          %v403 = vrcp.pop 64.0
          %v404 = vmul.f32 %v398, %v403
          %v405 = vmul.f32 %v402, %v403
          %v406 = vmul.f32 %v404, %v404
          %v407 = vsub.f32 %v405, %v406
          %v408 = vmax.f32 %v407, 0.0
          %v409 = vadd.f32 %v408, 1e-08
          %v410 = vrsqrt.pop %v409
          %412 = vrot.lane.b32.xlu0 %v404, 32
          %v413 = vpop.permute.xlu0 %412
          %415 = vrot.lane.b32.xlu0 %v404, 64
          %v416 = vpop.permute.xlu0 %415
          %418 = vrot.lane.b32.xlu0 %v404, 96
          %v419 = vpop.permute.xlu0 %418
          %vm421 = vcmask 261120
          %v422 = vsel %vm421, %v404, %v413
          %vm423 = vcmask 523264
          %v424 = vsel %vm423, %v422, %v416
          %vm425 = vcmask 785408
          %v426 = vsel %vm425, %v424, %v419
          %428 = vrot.lane.b32.xlu0 %v410, 32
          %v429 = vpop.permute.xlu0 %428
          %431 = vrot.lane.b32.xlu0 %v410, 64
          %v432 = vpop.permute.xlu0 %431
          %434 = vrot.lane.b32.xlu0 %v410, 96
          %v435 = vpop.permute.xlu0 %434
          %v437 = vsel %vm421, %v410, %v429
          %v438 = vsel %vm423, %v437, %v432
          %v439 = vsel %vm425, %v438, %v435
          %v440 = vlaneseq
          %v441 = vshrl.u32 %v440, 7
          %v442 = vsub.s32 0, %v441
          %v443 = vrot.slane %v426, %v442
          %v444 = vsub.f32 %v359, %v443
          %v445 = vsub.f32 %v360, %v443
          %v446 = vlaneseq
          %v447 = vshrl.u32 %v446, 7
          %v448 = vsub.s32 0, %v447
          %v449 = vrot.slane %v439, %v448
          %v450 = vmul.f32 %v444, %v449
          %v451 = vmul.f32 %v445, %v449
          %vm452 = vcmp.ge.f32.partialorder %v450, 0.0
          %vm453 = vcmp.ge.f32.partialorder %v451, 0.0
          %v454 = vmul.f32 %v450, 0.2
          %v455 = vmul.f32 %v451, 0.2
          %v456 = vsel %vm452, %v450, %v454
          %v457 = vsel %vm453, %v451, %v455
          %v458 = vpack.c.bf16 %v457, %v456
          %v460 = vunpack.c.l.b16 %v458
          %v461 = vunpack.c.h.b16 %v458
          %v462 = vpack.c.b16 %v460, %v460
          %v463 = vpack.c.b16 %v461, %v461
          %466 = vst [vmem:[%s228] sm:$0xf] %v462
          %467 = vst [vmem:[%s228 + $0x4] sm:$0xf] %v463
        $region77: #{g_forward.4} parent=64 // pred_fallthru
          _
        %p468 = scmp.lt.s32.totalorder %s17, 1
        %s469 = scalar_select %p468, %s17, 1
        %s470 = smul.addr %s469, 2
        %s471 = smul.addr %s470, 4
        %s472 = scalar_lea.vmem %s2, %s471
        // Predicated region
        $region78: #{g_forward.4} parent=64 // pred_check
          %p473 = pneg %p97
        $region79: #{g_forward.4} parent=64 // pred_check_branch
          %475 = sbr.rel (%p473) target = $region81
        $region80: #{g_forward.4} parent=64 // pred_region
          _
        $region81: #{g_forward.4} parent=64 // pred_fallthru
          _
      $region65: #{g_forward.4} parent=5 // pred_fallthru
        _
      %p476 = scmp.le.s32.totalorder 2, %s8
      // Predicated region
      $region82: #{g_forward.4} parent=5 // pred_check
        %p477 = pneg %p476
      $region83: #{g_forward.4} parent=5 // pred_check_branch
        %479 = sbr.rel (%p477) target = $region85
      $region84: #{g_forward.4} parent=5 // pred_region
        %s480 = ssub.s32 %s8, 2
        // Predicated region
        $region86: #{g_forward.4} parent=84 // pred_check
          %p481 = pneg %p103
        $region87: #{g_forward.4} parent=84 // pred_check_branch
          %483 = sbr.rel (%p481) target = $region89
        $region88: #{g_forward.4} parent=84 // pred_region
          %p484 = scmp.lt.s32.totalorder %s19, 1
          %s485 = scalar_select %p484, %s19, 1
          %s486 = smul.addr %s485, 2
          %s487 = smul.addr %s486, 4
          %s488 = scalar_lea.vmem %s2, %s487
        $region89: #{g_forward.4} parent=84 // pred_fallthru
          _
      $region85: #{g_forward.4} parent=5 // pred_fallthru
        _
    $region6: #{g_forward.4} parent=1 // loop_footer
      %s12 = sadd.s32 1, %s8
    $region7: #{g_forward.4} parent=1 // loop_footer_branch
      %7 = sbr.rel target = $region3
    $region8: #{g_forward.4} parent=1 // loop_exit
      _

// kernel: g_forward.5
$region0: #{g_forward.5}
  #allocation0 [shape = 'u32[]', space=smem, size = 0x4, offset = 0x4, fixed_abs, tag = 'smem constant byte address 0x4 - core index']
  #allocation1 [shape = 'u32[144,128]{1,0:T(1,128)}', space=vmem, size = 0x12000, scoped, tag = 'internal scratch']
  #allocation2 [shape = 'f32[64,12]{1,0:T(8,128)}', space=vmem, size = 0x8000, scoped, tag = 'scratch operand']
  %s0 = inlined_call_operand.vmem [shape: bf16[2,64,384], index: 0, kind: input, shape index: {}]
  %s1 = inlined_call_operand.vmem [shape: bf16[384,12], index: 1, kind: input, shape index: {}]
  %s2 = inlined_call_operand.vmem [shape: f32[2,64,12], index: 2, kind: output, shape index: {}]
  %s3 = sld [smem:[#allocation0]]
  $region49: #{g_forward.5} parent=0
    _
  %s5 = ssub.s32 1, %s3
  %s6 = scalar_select 0, %s5, %s3
  loop: start=0, step=1, limit=4
  $region2: #{g_forward.5} parent=0 // loop_pre_header
    _
  $region3: #{g_forward.5} parent=0 // loop_header
    %s8 = sphi 0, %s12
    %p9 = scmp.ge.s32.totalorder %s8, 4
    %s15 = sphi 0, %s27
    %s16 = sphi 0, %s23
    %s17 = sphi 0, %s15
    %s18 = sphi 0, %s16
    %s19 = sphi 0, %s17
    %s20 = sphi 0, %s18
    %s32 = sphi 0, %s34
    %s35 = sphi 0, %s32
    %s36 = sphi 0, %s35
    %s52 = sphi 0, %s36
    %s58 = sphi 0, %s60
    %s61 = sphi 0, %s58
    %s62 = sphi 0, %s61
    %s78 = sphi 0, %s62
    %s84 = sphi 0, %s86
    %s87 = sphi 0, %s84
    %s88 = sphi 0, %s87
    %s104 = sphi 0, %s88
  $region4: #{g_forward.5} parent=0 // loop_header_branch
    %11 = sbr.rel (%p9) target = $region8
  $region5: #{g_forward.5} parent=0 // loop_body
    %s13 = ssub.s32 %s8, 1
    %s14 = ssub.s32 %s8, 2
    %s21 = sadd.s32 1, %s16
    %p22 = scmp.ge.s32.totalorder %s21, 1
    %s23 = scalar_select %p22, 0, %s21
    %s24 = sadd.s32 1, %s15
    %s25 = scalar_select %p22, %s24, %s15
    %p26 = scmp.ge.s32.totalorder %s25, 2
    %s27 = scalar_select %p26, 0, %s25
    %s28 = ssub.s32 %s15, %s27
    %s29 = ssub.s32 %s16, %s23
    %s30 = sor.u32 %s28, %s29
    %p31 = scmp.eq.s32.totalorder %s30, 0
    %s33 = sadd.s32 %s32, 1
    %s34 = scalar_select %p31, %s32, %s33
    %p37 = pneg %p31
    %p38 = scmp.eq.s32.totalorder %s8, 1
    %p39 = por %p37, %p38
    %p40 = scmp.ne.s32.totalorder %s32, %s35
    %p41 = scmp.eq.s32.totalorder %s8, 0
    %p42 = por %p40, %p41
    %p43 = scmp.ne.s32.totalorder %s32, %s35
    %p44 = scmp.eq.s32.totalorder %s13, 1
    %p45 = por %p43, %p44
    %p46 = scmp.ne.s32.totalorder %s35, %s36
    %p47 = scmp.eq.s32.totalorder %s13, 0
    %p48 = por %p46, %p47
    %p49 = scmp.ne.s32.totalorder %s35, %s36
    %p50 = scmp.eq.s32.totalorder %s14, 1
    %p51 = por %p49, %p50
    %p53 = scmp.ne.s32.totalorder %s36, %s52
    %p54 = scmp.eq.s32.totalorder %s14, 0
    %p55 = por %p53, %p54
    %s56 = ssub.s32 %s16, %s23
    %p57 = scmp.eq.s32.totalorder %s56, 0
    %s59 = sadd.s32 %s58, 1
    %s60 = scalar_select %p57, %s58, %s59
    %p63 = pneg %p57
    %p64 = scmp.eq.s32.totalorder %s8, 1
    %p65 = por %p63, %p64
    %p66 = scmp.ne.s32.totalorder %s58, %s61
    %p67 = scmp.eq.s32.totalorder %s8, 0
    %p68 = por %p66, %p67
    %p69 = scmp.ne.s32.totalorder %s58, %s61
    %p70 = scmp.eq.s32.totalorder %s13, 1
    %p71 = por %p69, %p70
    %p72 = scmp.ne.s32.totalorder %s61, %s62
    %p73 = scmp.eq.s32.totalorder %s13, 0
    %p74 = por %p72, %p73
    %p75 = scmp.ne.s32.totalorder %s61, %s62
    %p76 = scmp.eq.s32.totalorder %s14, 1
    %p77 = por %p75, %p76
    %p79 = scmp.ne.s32.totalorder %s62, %s78
    %p80 = scmp.eq.s32.totalorder %s14, 0
    %p81 = por %p79, %p80
    %s82 = ssub.s32 %s15, %s27
    %p83 = scmp.eq.s32.totalorder %s82, 0
    %s85 = sadd.s32 %s84, 1
    %s86 = scalar_select %p83, %s84, %s85
    %p89 = pneg %p83
    %p90 = scmp.eq.s32.totalorder %s8, 1
    %p91 = por %p89, %p90
    %p92 = scmp.ne.s32.totalorder %s84, %s87
    %p93 = scmp.eq.s32.totalorder %s8, 0
    %p94 = por %p92, %p93
    %p95 = scmp.ne.s32.totalorder %s84, %s87
    %p96 = scmp.eq.s32.totalorder %s13, 1
    %p97 = por %p95, %p96
    %p98 = scmp.ne.s32.totalorder %s87, %s88
    %p99 = scmp.eq.s32.totalorder %s13, 0
    %p100 = por %p98, %p99
    %p101 = scmp.ne.s32.totalorder %s87, %s88
    %p102 = scmp.eq.s32.totalorder %s14, 1
    %p103 = por %p101, %p102
    %p105 = scmp.ne.s32.totalorder %s88, %s104
    %p106 = scmp.eq.s32.totalorder %s14, 0
    %p107 = por %p105, %p106
    %p108 = scmp.le.s32.totalorder 1, %s8
    %p109 = scmp.lt.s32.totalorder %s8, 3
    %p110 = pnand %p108, %p109
    %p111 = pneg %p110
    // Predicated region
    $region9: #{g_forward.5} parent=5 // pred_check
      _
    $region10: #{g_forward.5} parent=5 // pred_check_branch
      %113 = sbr.rel (%p110) target = $region12
    $region11: #{g_forward.5} parent=5 // pred_region
      %s114 = ssub.s32 %s8, 1
      // Predicated region
      $region13: #{g_forward.5} parent=11 // pred_check
        %p115 = pneg %p74
      $region14: #{g_forward.5} parent=11 // pred_check_branch
        %117 = sbr.rel (%p115) target = $region16
      $region15: #{g_forward.5} parent=11 // pred_region
        %s118 = smul.u32 48, %s18
        %p119 = scmp.lt.s32.totalorder %s118, 47
        %s120 = scalar_select %p119, %s118, 47
        %s121 = smul.addr %s120, 4
        %s122 = scalar_lea.vmem %s1, %s121
        %s123 = smul.u32 48, %s18
      $region16: #{g_forward.5} parent=11 // pred_fallthru
        _
    $region12: #{g_forward.5} parent=5 // pred_fallthru
      _
    %p124 = scmp.lt.s32.totalorder %s8, 2
    // Predicated region
    $region17: #{g_forward.5} parent=5 // pred_check
      %p125 = pneg %p124
    $region18: #{g_forward.5} parent=5 // pred_check_branch
      %127 = sbr.rel (%p125) target = $region20
    $region19: #{g_forward.5} parent=5 // pred_region
      // Predicated region
      $region21: #{g_forward.5} parent=19 // pred_check
        %p128 = pneg %p42
      $region22: #{g_forward.5} parent=19 // pred_check_branch
        %130 = sbr.rel (%p128) target = $region24
      $region23: #{g_forward.5} parent=19 // pred_region
        %s131 = smul.u32 3, %s16
        %p132 = scmp.lt.s32.totalorder %s15, 1
        %s133 = scalar_select %p132, %s15, 1
        %p134 = scmp.lt.s32.totalorder %s131, 2
        %s135 = scalar_select %p134, %s131, 2
        %s136 = smul.addr %s133, 24
        %s137 = sadd.s32 %s135, %s136
        %s138 = smul.addr %s137, 4
        %s139 = scalar_lea.vmem %s0, %s138
        %s140 = smul.u32 3, %s16
      $region24: #{g_forward.5} parent=19 // pred_fallthru
        _
    $region20: #{g_forward.5} parent=5 // pred_fallthru
      _
    %p141 = scmp.le.s32.totalorder 1, %s8
    %p142 = scmp.lt.s32.totalorder %s8, 3
    %p143 = pnand %p141, %p142
    %p144 = pneg %p143
    // Predicated region
    $region25: #{g_forward.5} parent=5 // pred_check
      _
    $region26: #{g_forward.5} parent=5 // pred_check_branch
      %146 = sbr.rel (%p143) target = $region28
    $region27: #{g_forward.5} parent=5 // pred_region
      %s147 = ssub.s32 %s8, 1
      %s148 = smul.u32 3, %s18
      %p149 = scmp.lt.s32.totalorder %s17, 1
      %s150 = scalar_select %p149, %s17, 1
      %p151 = scmp.lt.s32.totalorder %s148, 2
      %s152 = scalar_select %p151, %s148, 2
      %s153 = smul.addr %s150, 24
      %s154 = sadd.s32 %s152, %s153
      %s155 = smul.addr %s154, 4
      %s156 = scalar_lea.vmem %s0, %s155
      %p157 = pneg %p48
      %p158 = pneg %p45
      %s159 = smul.u32 48, %s18
      %p160 = scmp.lt.s32.totalorder %s159, 47
      %s161 = scalar_select %p160, %s159, 47
      %s162 = smul.addr %s161, 4
      %s163 = scalar_lea.vmem %s1, %s162
      %p164 = pneg %p74
      %p165 = pneg %p71
      %p166 = pneg %p100
      %p167 = pneg %p97
      %p168 = scmp.lt.s32.totalorder %s17, 1
      %s169 = scalar_select %p168, %s17, 1
      %s170 = smul.addr %s169, 8
      %s171 = smul.addr %s170, 8
      %s172 = scalar_lea.vmem %s2, %s171
      %s173 = smul.u32 3, %s18
      %p174 = scmp.lt.s32.totalorder %s17, 1
      %s175 = scalar_select %p174, %s17, 1
      %p176 = scmp.lt.s32.totalorder %s173, 2
      %s177 = scalar_select %p176, %s173, 2
      %s178 = smul.addr %s175, 24
      %s179 = sadd.s32 %s177, %s178
      %s180 = smul.addr %s179, 4
      %s181 = scalar_lea.vmem %s0, %s180
      %s182 = smul.u32 3, %s18
      %s183 = smul.u32 48, %s18
      %p184 = scmp.lt.s32.totalorder %s183, 47
      %s185 = scalar_select %p184, %s183, 47
      %s186 = smul.addr %s185, 4
      %s187 = scalar_lea.vmem %s1, %s186
      %s188 = smul.u32 48, %s18
      %p189 = scmp.lt.s32.totalorder %s17, 1
      %s190 = scalar_select %p189, %s17, 1
      %s191 = smul.addr %s190, 8
      %s192 = smul.addr %s191, 8
      %s193 = scalar_lea.vmem %s2, %s192
      %p195 = scmp.eq.s32.totalorder %s18, 0
      // Predicated region
      $region29: #{g_forward.5} parent=27 // pred_check
        %p196 = pneg %p195
      $region30: #{g_forward.5} parent=27 // pred_check_branch
        %198 = sbr.rel (%p196) target = $region32
      $region31: #{g_forward.5} parent=27 // pred_region
        %vm199 = vcmask 97280
        %200 = vst.msk [vmem:[#allocation2] sm:$0xff] %vm199, 0.0
        %201 = vst.msk [vmem:[#allocation2 + $0x8] sm:$0xff] %vm199, 0.0
        %202 = vst.msk [vmem:[#allocation2 + $0x10] sm:$0xff] %vm199, 0.0
        %203 = vst.msk [vmem:[#allocation2 + $0x18] sm:$0xff] %vm199, 0.0
        %204 = vst.msk [vmem:[#allocation2 + $0x20] sm:$0xff] %vm199, 0.0
        %205 = vst.msk [vmem:[#allocation2 + $0x28] sm:$0xff] %vm199, 0.0
        %206 = vst.msk [vmem:[#allocation2 + $0x30] sm:$0xff] %vm199, 0.0
        %207 = vst.msk [vmem:[#allocation2 + $0x38] sm:$0xff] %vm199, 0.0
      $region32: #{g_forward.5} parent=27 // pred_fallthru
        _
      %v208 = vld [vmem:[#allocation2] sm:$0xff]
      %v209 = vld [vmem:[#allocation2 + $0x8] sm:$0xff]
      %v210 = vld [vmem:[#allocation2 + $0x10] sm:$0xff]
      %v211 = vld [vmem:[#allocation2 + $0x18] sm:$0xff]
      %v212 = vld [vmem:[#allocation2 + $0x20] sm:$0xff]
      %v213 = vld [vmem:[#allocation2 + $0x28] sm:$0xff]
      %v214 = vld [vmem:[#allocation2 + $0x30] sm:$0xff]
      %v215 = vld [vmem:[#allocation2 + $0x38] sm:$0xff]
      %v216 = vld [vmem:[%s181] sm:$0xff]
      %v217 = vld [vmem:[%s181 + $0x8] sm:$0xf]
      %v218 = vld [vmem:[%s181 + $0xc] sm:$0xff]
      %v219 = vld [vmem:[%s181 + $0x14] sm:$0xf]
      %v220 = vld [vmem:[%s181 + $0x18] sm:$0xff]
      %v221 = vld [vmem:[%s181 + $0x20] sm:$0xf]
      %v222 = vld [vmem:[%s181 + $0x24] sm:$0xff]
      %v223 = vld [vmem:[%s181 + $0x2c] sm:$0xf]
      %v224 = vld [vmem:[%s181 + $0x30] sm:$0xff]
      %v225 = vld [vmem:[%s181 + $0x38] sm:$0xf]
      %v226 = vld [vmem:[%s181 + $0x3c] sm:$0xff]
      %v227 = vld [vmem:[%s181 + $0x44] sm:$0xf]
      %v228 = vld [vmem:[%s181 + $0x48] sm:$0xff]
      %v229 = vld [vmem:[%s181 + $0x50] sm:$0xf]
      %v230 = vld [vmem:[%s181 + $0x54] sm:$0xff]
      %v231 = vld [vmem:[%s181 + $0x5c] sm:$0xf]
      %v232 = vld [vmem:[%s187] sm:$0xf]
      %v233 = vld [vmem:[%s187 + $0x4] sm:$0xf]
      %v234 = vld [vmem:[%s187 + $0x8] sm:$0xf]
      %v235 = vld [vmem:[%s187 + $0xc] sm:$0xf]
      %v236 = vld [vmem:[%s187 + $0x10] sm:$0xf]
      %v237 = vld [vmem:[%s187 + $0x14] sm:$0xf]
      %v238 = vld [vmem:[%s187 + $0x18] sm:$0xf]
      %v239 = vld [vmem:[%s187 + $0x1c] sm:$0xf]
      %v240 = vld [vmem:[%s187 + $0x20] sm:$0xf]
      %v241 = vld [vmem:[%s187 + $0x24] sm:$0xf]
      %v242 = vld [vmem:[%s187 + $0x28] sm:$0xf]
      %v243 = vld [vmem:[%s187 + $0x2c] sm:$0xf]
      %v244 = vld [vmem:[%s187 + $0x30] sm:$0xf]
      %v245 = vld [vmem:[%s187 + $0x34] sm:$0xf]
      %v246 = vld [vmem:[%s187 + $0x38] sm:$0xf]
      %v247 = vld [vmem:[%s187 + $0x3c] sm:$0xf]
      %v248 = vld [vmem:[%s187 + $0x40] sm:$0xf]
      %v249 = vld [vmem:[%s187 + $0x44] sm:$0xf]
      %v250 = vld [vmem:[%s187 + $0x48] sm:$0xf]
      %v251 = vld [vmem:[%s187 + $0x4c] sm:$0xf]
      %v252 = vld [vmem:[%s187 + $0x50] sm:$0xf]
      %v253 = vld [vmem:[%s187 + $0x54] sm:$0xf]
      %v254 = vld [vmem:[%s187 + $0x58] sm:$0xf]
      %v255 = vld [vmem:[%s187 + $0x5c] sm:$0xf]
      %v256 = vld [vmem:[%s187 + $0x60] sm:$0xf]
      %v257 = vld [vmem:[%s187 + $0x64] sm:$0xf]
      %v258 = vld [vmem:[%s187 + $0x68] sm:$0xf]
      %v259 = vld [vmem:[%s187 + $0x6c] sm:$0xf]
      %v260 = vld [vmem:[%s187 + $0x70] sm:$0xf]
      %v261 = vld [vmem:[%s187 + $0x74] sm:$0xf]
      %v262 = vld [vmem:[%s187 + $0x78] sm:$0xf]
      %v263 = vld [vmem:[%s187 + $0x7c] sm:$0xf]
      %v264 = vld [vmem:[%s187 + $0x80] sm:$0xf]
      %v265 = vld [vmem:[%s187 + $0x84] sm:$0xf]
      %v266 = vld [vmem:[%s187 + $0x88] sm:$0xf]
      %v267 = vld [vmem:[%s187 + $0x8c] sm:$0xf]
      %v268 = vld [vmem:[%s187 + $0x90] sm:$0xf]
      %v269 = vld [vmem:[%s187 + $0x94] sm:$0xf]
      %v270 = vld [vmem:[%s187 + $0x98] sm:$0xf]
      %v271 = vld [vmem:[%s187 + $0x9c] sm:$0xf]
      %v272 = vld [vmem:[%s187 + $0xa0] sm:$0xf]
      %v273 = vld [vmem:[%s187 + $0xa4] sm:$0xf]
      %v274 = vld [vmem:[%s187 + $0xa8] sm:$0xf]
      %v275 = vld [vmem:[%s187 + $0xac] sm:$0xf]
      %v276 = vld [vmem:[%s187 + $0xb0] sm:$0xf]
      %v277 = vld [vmem:[%s187 + $0xb4] sm:$0xf]
      %v278 = vld [vmem:[%s187 + $0xb8] sm:$0xf]
      %v279 = vld [vmem:[%s187 + $0xbc] sm:$0xf]
      %v296 = vunpack.c.l.b16 %v216
      %v297 = vunpack.c.h.b16 %v216
      %v298 = vunpack.c.l.b16 %v217
      %v299 = vunpack.c.l.b16 %v218
      %v300 = vunpack.c.h.b16 %v218
      %v301 = vunpack.c.l.b16 %v219
      %v302 = vunpack.c.l.b16 %v220
      %v303 = vunpack.c.h.b16 %v220
      %v304 = vunpack.c.l.b16 %v221
      %v305 = vunpack.c.l.b16 %v222
      %v306 = vunpack.c.h.b16 %v222
      %v307 = vunpack.c.l.b16 %v223
      %v308 = vunpack.c.l.b16 %v224
      %v309 = vunpack.c.h.b16 %v224
      %v310 = vunpack.c.l.b16 %v225
      %v311 = vunpack.c.l.b16 %v226
      %v312 = vunpack.c.h.b16 %v226
      %v313 = vunpack.c.l.b16 %v227
      %v314 = vunpack.c.l.b16 %v228
      %v315 = vunpack.c.h.b16 %v228
      %v316 = vunpack.c.l.b16 %v229
      %v317 = vunpack.c.l.b16 %v230
      %v318 = vunpack.c.h.b16 %v230
      %v319 = vunpack.c.l.b16 %v231
      %v320 = vpack.c.b16 %v299, %v296
      %v321 = vpack.c.b16 %v300, %v297
      %v322 = vpack.c.b16 %v301, %v298
      %v323 = vpack.c.b16 %v305, %v302
      %v324 = vpack.c.b16 %v306, %v303
      %v325 = vpack.c.b16 %v307, %v304
      %v326 = vpack.c.b16 %v311, %v308
      %v327 = vpack.c.b16 %v312, %v309
      %v328 = vpack.c.b16 %v313, %v310
      %v329 = vpack.c.b16 %v317, %v314
      %v330 = vpack.c.b16 %v318, %v315
      %v331 = vpack.c.b16 %v319, %v316
      %v392 = vunpack.c.l.b16 %v232
      %v393 = vunpack.c.l.b16 %v233
      %v394 = vunpack.c.l.b16 %v234
      %v395 = vunpack.c.l.b16 %v235
      %v396 = vunpack.c.l.b16 %v236
      %v397 = vunpack.c.l.b16 %v237
      %v398 = vunpack.c.l.b16 %v238
      %v399 = vunpack.c.l.b16 %v239
      %v400 = vunpack.c.l.b16 %v240
      %v401 = vunpack.c.l.b16 %v241
      %v402 = vunpack.c.l.b16 %v242
      %v403 = vunpack.c.l.b16 %v243
      %v404 = vunpack.c.l.b16 %v244
      %v405 = vunpack.c.l.b16 %v245
      %v406 = vunpack.c.l.b16 %v246
      %v407 = vunpack.c.l.b16 %v247
      %v408 = vunpack.c.l.b16 %v248
      %v409 = vunpack.c.l.b16 %v249
      %v410 = vunpack.c.l.b16 %v250
      %v411 = vunpack.c.l.b16 %v251
      %v412 = vunpack.c.l.b16 %v252
      %v413 = vunpack.c.l.b16 %v253
      %v414 = vunpack.c.l.b16 %v254
      %v415 = vunpack.c.l.b16 %v255
      %v416 = vunpack.c.l.b16 %v256
      %v417 = vunpack.c.l.b16 %v257
      %v418 = vunpack.c.l.b16 %v258
      %v419 = vunpack.c.l.b16 %v259
      %v420 = vunpack.c.l.b16 %v260
      %v421 = vunpack.c.l.b16 %v261
      %v422 = vunpack.c.l.b16 %v262
      %v423 = vunpack.c.l.b16 %v263
      %v424 = vunpack.c.l.b16 %v264
      %v425 = vunpack.c.l.b16 %v265
      %v426 = vunpack.c.l.b16 %v266
      %v427 = vunpack.c.l.b16 %v267
      %v428 = vunpack.c.l.b16 %v268
      %v429 = vunpack.c.l.b16 %v269
      %v430 = vunpack.c.l.b16 %v270
      %v431 = vunpack.c.l.b16 %v271
      %v432 = vunpack.c.l.b16 %v272
      %v433 = vunpack.c.l.b16 %v273
      %v434 = vunpack.c.l.b16 %v274
      %v435 = vunpack.c.l.b16 %v275
      %v436 = vunpack.c.l.b16 %v276
      %v437 = vunpack.c.l.b16 %v277
      %v438 = vunpack.c.l.b16 %v278
      %v439 = vunpack.c.l.b16 %v279
      %v440 = vpack.c.b16 %v393, %v392
      %v441 = vpack.c.b16 %v395, %v394
      %v442 = vpack.c.b16 %v397, %v396
      %v443 = vpack.c.b16 %v399, %v398
      %v444 = vpack.c.b16 %v401, %v400
      %v445 = vpack.c.b16 %v403, %v402
      %v446 = vpack.c.b16 %v405, %v404
      %v447 = vpack.c.b16 %v407, %v406
      %v448 = vpack.c.b16 %v409, %v408
      %v449 = vpack.c.b16 %v411, %v410
      %v450 = vpack.c.b16 %v413, %v412
      %v451 = vpack.c.b16 %v415, %v414
      %v452 = vpack.c.b16 %v417, %v416
      %v453 = vpack.c.b16 %v419, %v418
      %v454 = vpack.c.b16 %v421, %v420
      %v455 = vpack.c.b16 %v423, %v422
      %v456 = vpack.c.b16 %v425, %v424
      %v457 = vpack.c.b16 %v427, %v426
      %v458 = vpack.c.b16 %v429, %v428
      %v459 = vpack.c.b16 %v431, %v430
      %v460 = vpack.c.b16 %v433, %v432
      %v461 = vpack.c.b16 %v435, %v434
      %v462 = vpack.c.b16 %v437, %v436
      %v463 = vpack.c.b16 %v439, %v438
      %488 = vmatprep.subr.bf16.mxu0 0
      %489 = vmatpush1.bf16.msra.mxu0 %v447
      %490 = vmatprep.subr.bf16.mxu0 0
      %491 = vmatpush1.bf16.msra.mxu0 %v446
      %492 = vmatprep.subr.bf16.mxu0 0
      %493 = vmatpush1.bf16.msra.mxu0 %v445
      %494 = vmatprep.subr.bf16.mxu0 0
      %495 = vmatpush1.bf16.msra.mxu0 %v444
      %496 = vmatprep.subr.bf16.mxu0 0
      %497 = vmatpush1.bf16.msra.mxu0 %v443
      %498 = vmatprep.subr.bf16.mxu0 0
      %499 = vmatpush1.bf16.msra.mxu0 %v442
      %500 = vmatprep.subr.bf16.mxu0 0
      %501 = vmatpush1.bf16.msra.mxu0 %v441
      %502 = vmatprep.subr.bf16.mxu0 0
      %503 = vmatpush1.bf16.msra.mxu0 %v440
      %504 = vmatprep.subr.bf16.mxu0 0
      %505 = vmatpush2.bf16.msra.mxu0 %v455
      %506 = vmatprep.subr.bf16.mxu0 0
      %507 = vmatpush2.bf16.msra.mxu0 %v454
      %508 = vmatprep.subr.bf16.mxu0 0
      %509 = vmatpush2.bf16.msra.mxu0 %v453
      %510 = vmatprep.subr.bf16.mxu0 0
      %511 = vmatpush2.bf16.msra.mxu0 %v452
      %512 = vmatprep.subr.bf16.mxu0 0
      %513 = vmatpush2.bf16.msra.mxu0 %v451
      %514 = vmatprep.subr.bf16.mxu0 0
      %515 = vmatpush2.bf16.msra.mxu0 %v450
      %516 = vmatprep.subr.bf16.mxu0 0
      %517 = vmatpush2.bf16.msra.mxu0 %v449
      %518 = vmatprep.subr.bf16.mxu0 0
      %519 = vmatpush2.bf16.msra.mxu0 %v448
      %520 = vmatprep.mubr.bf16.mxu0 %v321
      %521 = vmatmul.mubr.bf16.gmra.mxu0 %v320
      %v522 = vpop.f32.mrf.mxu0
      %v523 = vadd.f32 0.0, %v522
      %v524 = vpop.f32.mrf.mxu0
      %v525 = vpop.f32.mrf.mxu0
      %v526 = vadd.f32 0.0, %v525
      %v527 = vpop.f32.mrf.mxu0
      %528 = vmatprep.mubr.bf16.mxu0 %v324
      %529 = vmatmul.mubr.bf16.gmra.mxu0 %v323
      %v530 = vpop.f32.mrf.mxu0
      %v531 = vadd.f32 0.0, %v530
      %v532 = vpop.f32.mrf.mxu0
      %v533 = vpop.f32.mrf.mxu0
      %v534 = vadd.f32 0.0, %v533
      %v535 = vpop.f32.mrf.mxu0
      %536 = vmatprep.mubr.bf16.mxu0 %v327
      %537 = vmatmul.mubr.bf16.gmra.mxu0 %v326
      %v538 = vpop.f32.mrf.mxu0
      %v539 = vadd.f32 0.0, %v538
      %v540 = vpop.f32.mrf.mxu0
      %v541 = vpop.f32.mrf.mxu0
      %v542 = vadd.f32 0.0, %v541
      %v543 = vpop.f32.mrf.mxu0
      %544 = vmatprep.mubr.bf16.mxu0 %v330
      %545 = vmatmul.mubr.bf16.gmra.mxu0 %v329
      %v546 = vpop.f32.mrf.mxu0
      %v547 = vadd.f32 0.0, %v546
      %v548 = vpop.f32.mrf.mxu0
      %v549 = vpop.f32.mrf.mxu0
      %v550 = vadd.f32 0.0, %v549
      %v551 = vpop.f32.mrf.mxu0
      %552 = vdwg.mxu0
      %553 = vmatprep.subr.bf16.mxu0 0
      %554 = vmatpush1.bf16.msra.mxu0 %v463
      %555 = vmatprep.subr.bf16.mxu0 0
      %556 = vmatpush1.bf16.msra.mxu0 %v462
      %557 = vmatprep.subr.bf16.mxu0 0
      %558 = vmatpush1.bf16.msra.mxu0 %v461
      %559 = vmatprep.subr.bf16.mxu0 0
      %560 = vmatpush1.bf16.msra.mxu0 %v460
      %561 = vmatprep.subr.bf16.mxu0 0
      %562 = vmatpush1.bf16.msra.mxu0 %v459
      %563 = vmatprep.subr.bf16.mxu0 0
      %564 = vmatpush1.bf16.msra.mxu0 %v458
      %565 = vmatprep.subr.bf16.mxu0 0
      %566 = vmatpush1.bf16.msra.mxu0 %v457
      %567 = vmatprep.subr.bf16.mxu0 0
      %568 = vmatpush1.bf16.msra.mxu0 %v456
      %569 = vmatprep.subr.bf16.mxu0 0
      %570 = vmatpush2.bf16.msra.mxu0 0
      %571 = vmatprep.subr.bf16.mxu0 0
      %572 = vmatpush2.bf16.msra.mxu0 0
      %573 = vmatprep.subr.bf16.mxu0 0
      %574 = vmatpush2.bf16.msra.mxu0 0
      %575 = vmatprep.subr.bf16.mxu0 0
      %576 = vmatpush2.bf16.msra.mxu0 0
      %577 = vmatprep.subr.bf16.mxu0 0
      %578 = vmatpush2.bf16.msra.mxu0 0
      %579 = vmatprep.subr.bf16.mxu0 0
      %580 = vmatpush2.bf16.msra.mxu0 0
      %581 = vmatprep.subr.bf16.mxu0 0
      %582 = vmatpush2.bf16.msra.mxu0 0
      %583 = vmatprep.subr.bf16.mxu0 0
      %584 = vmatpush2.bf16.msra.mxu0 0
      %585 = vmatprep.mubr.bf16.mxu0 0
      %586 = vmatmul.mubr.bf16.gmra.mxu0 %v322
      %v587 = vpop.f32.mrf.mxu0
      %v588 = vadd.f32 %v523, %v587
      %v589 = vpop.f32.mrf.mxu0
      %v590 = vpop.f32.mrf.mxu0
      %v591 = vadd.f32 %v526, %v590
      %v592 = vpop.f32.mrf.mxu0
      %593 = vmatprep.mubr.bf16.mxu0 0
      %594 = vmatmul.mubr.bf16.gmra.mxu0 %v325
      %v595 = vpop.f32.mrf.mxu0
      %v596 = vadd.f32 %v531, %v595
      %v597 = vpop.f32.mrf.mxu0
      %v598 = vpop.f32.mrf.mxu0
      %v599 = vadd.f32 %v534, %v598
      %v600 = vpop.f32.mrf.mxu0
      %601 = vmatprep.mubr.bf16.mxu0 0
      %602 = vmatmul.mubr.bf16.gmra.mxu0 %v328
      %v603 = vpop.f32.mrf.mxu0
      %v604 = vadd.f32 %v539, %v603
      %v605 = vpop.f32.mrf.mxu0
      %v606 = vpop.f32.mrf.mxu0
      %v607 = vadd.f32 %v542, %v606
      %v608 = vpop.f32.mrf.mxu0
      %609 = vmatprep.mubr.bf16.mxu0 0
      %610 = vmatmul.mubr.bf16.gmra.mxu0 %v331
      %v611 = vpop.f32.mrf.mxu0
      %v612 = vadd.f32 %v547, %v611
      %v613 = vpop.f32.mrf.mxu0
      %v614 = vpop.f32.mrf.mxu0
      %v615 = vadd.f32 %v550, %v614
      %v616 = vpop.f32.mrf.mxu0
      %617 = vdwg.mxu0
      %v618 = vadd.f32 %v208, %v588
      %v619 = vadd.f32 %v209, %v591
      %v620 = vadd.f32 %v210, %v596
      %v621 = vadd.f32 %v211, %v599
      %v622 = vadd.f32 %v212, %v604
      %v623 = vadd.f32 %v213, %v607
      %v624 = vadd.f32 %v214, %v612
      %v625 = vadd.f32 %v215, %v615
      %vm626 = vcmask 97280
      %627 = vst.msk [vmem:[#allocation2] sm:$0xff] %vm626, %v618
      %628 = vst.msk [vmem:[#allocation2 + $0x8] sm:$0xff] %vm626, %v619
      %629 = vst.msk [vmem:[#allocation2 + $0x10] sm:$0xff] %vm626, %v620
      %630 = vst.msk [vmem:[#allocation2 + $0x18] sm:$0xff] %vm626, %v621
      %631 = vst.msk [vmem:[#allocation2 + $0x20] sm:$0xff] %vm626, %v622
      %632 = vst.msk [vmem:[#allocation2 + $0x28] sm:$0xff] %vm626, %v623
      %633 = vst.msk [vmem:[#allocation2 + $0x30] sm:$0xff] %vm626, %v624
      %634 = vst.msk [vmem:[#allocation2 + $0x38] sm:$0xff] %vm626, %v625
      // Predicated region
      $region33: #{g_forward.5} parent=27 // pred_check
        %p635 = pneg %p195
      $region34: #{g_forward.5} parent=27 // pred_check_branch
        %637 = sbr.rel (%p635) target = $region36
      $region35: #{g_forward.5} parent=27 // pred_region
        %v638 = vld [vmem:[#allocation2] sm:$0xff]
        %v639 = vld [vmem:[#allocation2 + $0x8] sm:$0xff]
        %v640 = vld [vmem:[#allocation2 + $0x10] sm:$0xff]
        %v641 = vld [vmem:[#allocation2 + $0x18] sm:$0xff]
        %v642 = vld [vmem:[#allocation2 + $0x20] sm:$0xff]
        %v643 = vld [vmem:[#allocation2 + $0x28] sm:$0xff]
        %v644 = vld [vmem:[#allocation2 + $0x30] sm:$0xff]
        %v645 = vld [vmem:[#allocation2 + $0x38] sm:$0xff]
        %v646 = vtanh.pop %v638
        %v647 = vtanh.pop %v639
        %v648 = vtanh.pop %v640
        %v649 = vtanh.pop %v641
        %v650 = vtanh.pop %v642
        %v651 = vtanh.pop %v643
        %v652 = vtanh.pop %v644
        %v653 = vtanh.pop %v645
        %654 = vst.msk [vmem:[%s193] sm:$0xff] %vm626, %v646
        %655 = vst.msk [vmem:[%s193 + $0x8] sm:$0xff] %vm626, %v647
        %656 = vst.msk [vmem:[%s193 + $0x10] sm:$0xff] %vm626, %v648
        %657 = vst.msk [vmem:[%s193 + $0x18] sm:$0xff] %vm626, %v649
        %658 = vst.msk [vmem:[%s193 + $0x20] sm:$0xff] %vm626, %v650
        %659 = vst.msk [vmem:[%s193 + $0x28] sm:$0xff] %vm626, %v651
        %660 = vst.msk [vmem:[%s193 + $0x30] sm:$0xff] %vm626, %v652
        %661 = vst.msk [vmem:[%s193 + $0x38] sm:$0xff] %vm626, %v653
      $region36: #{g_forward.5} parent=27 // pred_fallthru
        _
      %p662 = scmp.lt.s32.totalorder %s17, 1
      %s663 = scalar_select %p662, %s17, 1
      %s664 = smul.addr %s663, 8
      %s665 = smul.addr %s664, 8
      %s666 = scalar_lea.vmem %s2, %s665
      // Predicated region
      $region37: #{g_forward.5} parent=27 // pred_check
        %p667 = pneg %p97
      $region38: #{g_forward.5} parent=27 // pred_check_branch
        %669 = sbr.rel (%p667) target = $region40
      $region39: #{g_forward.5} parent=27 // pred_region
        _
      $region40: #{g_forward.5} parent=27 // pred_fallthru
        _
    $region28: #{g_forward.5} parent=5 // pred_fallthru
      _
    %p670 = scmp.le.s32.totalorder 2, %s8
    // Predicated region
    $region41: #{g_forward.5} parent=5 // pred_check
      %p671 = pneg %p670
    $region42: #{g_forward.5} parent=5 // pred_check_branch
      %673 = sbr.rel (%p671) target = $region44
    $region43: #{g_forward.5} parent=5 // pred_region
      %s674 = ssub.s32 %s8, 2
      // Predicated region
      $region45: #{g_forward.5} parent=43 // pred_check
        %p675 = pneg %p103
      $region46: #{g_forward.5} parent=43 // pred_check_branch
        %677 = sbr.rel (%p675) target = $region48
      $region47: #{g_forward.5} parent=43 // pred_region
        %p678 = scmp.lt.s32.totalorder %s19, 1
        %s679 = scalar_select %p678, %s19, 1
        %s680 = smul.addr %s679, 8
        %s681 = smul.addr %s680, 8
        %s682 = scalar_lea.vmem %s2, %s681
      $region48: #{g_forward.5} parent=43 // pred_fallthru
        _
    $region44: #{g_forward.5} parent=5 // pred_fallthru
      _
  $region6: #{g_forward.5} parent=0 // loop_footer
    %s12 = sadd.s32 1, %s8
  $region7: #{g_forward.5} parent=0 // loop_footer_branch
    %7 = sbr.rel target = $region3
  $region8: #{g_forward.5} parent=0 // loop_exit
    _

</llo_original>
